<compile_context>
chip_gen: v6e
topology: v6e:2x2x1
jax: 0.10.0
libtpu: 0.0.40
codegen_flags: <defaults>
</compile_context>

<pallas_src>
import jax
import jax.numpy as jnp
from jax.experimental import pallas as pl
from jax.experimental.pallas import tpu as pltpu  # noqa: F401  (kept for scaling knobs)

# ---- small, ViT-like test configuration ----
BATCH = 2
SEQ = 8
EMB = 32
HEADS = 4
MLP_SIZE = 32
HEAD_DIM = EMB // HEADS
LN_EPS = 1e-5

# Set to jnp.bfloat16 on v6e / v7x at production ViT sizes (keep fp32 accumulation).
MXU_DTYPE = jnp.float32


def _layernorm(x, gamma, beta):
    mean = jnp.mean(x, axis=-1, keepdims=True)
    var = jnp.mean((x - mean) ** 2, axis=-1, keepdims=True)
    return (x - mean) * jax.lax.rsqrt(var + LN_EPS) * gamma + beta


def _gelu_exact(x):
    # PyTorch nn.GELU() default = exact erf-based GELU.
    # TODO(synk): if the accuracy contract allows, switch to tanh-approx GELU (EUP tanh).
    return 0.5 * x * (1.0 + jax.lax.erf(x * (1.0 / jnp.sqrt(2.0))))


def _mm(a, b):
    """Plain (tokens, K) @ (K, N) MXU matmul with fp32 accumulation."""
    return jnp.dot(a.astype(MXU_DTYPE), b.astype(MXU_DTYPE),
                   preferred_element_type=jnp.float32)


def _bmm(a, b, contract_a, contract_b):
    """Batched (over dim 0) matmul contracting (contract_a of a) with (contract_b of b)."""
    return jax.lax.dot_general(
        a.astype(MXU_DTYPE), b.astype(MXU_DTYPE),
        (((contract_a,), (contract_b,)), ((0,), (0,))),
        preferred_element_type=jnp.float32)


def vit_encoder_kernel(x_ref,
                       ln1_g_ref, ln1_b_ref,
                       w_in_ref, b_in_ref,
                       w_out_ref, b_out_ref,
                       ln2_g_ref, ln2_b_ref,
                       w1_ref, b1_ref,
                       w2_ref, b2_ref,
                       out_ref):
    x = x_ref[...]  # (B*S, E), token-major, all batch elements at once

    # ---------------- Multi-head self-attention block ----------------
    xn = _layernorm(x, ln1_g_ref[0], ln1_b_ref[0])
    qkv = _mm(xn, w_in_ref[...]) + b_in_ref[0]                  # (B*S, 3E)

    # Split q/k/v and expose the batch dim for head-batched attention.
    # (B*S, E) -> (B, S, E) is a layout no-op (second-minor fold by the sublane count).
    q = qkv[:, 0 * EMB:1 * EMB].reshape(BATCH, SEQ, EMB)
    k = qkv[:, 1 * EMB:2 * EMB].reshape(BATCH, SEQ, EMB)
    v = qkv[:, 2 * EMB:3 * EMB].reshape(BATCH, SEQ, EMB)
    w_out = w_out_ref[...]                                       # (E, E), loaded once

    scale = float(HEAD_DIM) ** -0.5
    attn_out = jnp.zeros((BATCH * SEQ, EMB), jnp.float32)
    for h in range(HEADS):                                       # static unroll over heads
        sl = slice(h * HEAD_DIM, (h + 1) * HEAD_DIM)
        qh, kh, vh = q[:, :, sl], k[:, :, sl], v[:, :, sl]       # (B, S, D)

        # scores = qh @ kh^T, batched over B, contracting on D (no transpose materialized)
        s = _bmm(qh, kh, 2, 2) * scale                           # (B, S, S)
        s = s - jnp.max(s, axis=-1, keepdims=True)
        p = jnp.exp(s)
        # EUP approximate reciprocal instead of a VALU divide.
        p = p * pl.reciprocal(jnp.sum(p, axis=-1, keepdims=True), approx=True)

        ctx = _bmm(p, vh, 2, 1)                                  # (B, S, D)

        # Fuse "concat heads -> out_proj" into a per-head accumulate:
        #   attn_out += ctx_h @ W_out[h*D:(h+1)*D, :]
        attn_out = attn_out + _mm(ctx.reshape(BATCH * SEQ, HEAD_DIM), w_out[sl, :])

    x1 = x + attn_out + b_out_ref[0]                             # residual 1 (+ out-proj bias)

    # ---------------- MLP block (dropout = identity at inference) ----------------
    x1n = _layernorm(x1, ln2_g_ref[0], ln2_b_ref[0])
    h1 = _gelu_exact(_mm(x1n, w1_ref[...]) + b1_ref[0])
    y = _mm(h1, w2_ref[...]) + b2_ref[0]

    out_ref[...] = (x1 + y).astype(out_ref.dtype)                # residual 2


def vit_encoder(x, params):
    B, S, E = x.shape
    # Token-major presentation: (B, S, E) -> (B*S, E).  At real ViT sizes E is a
    # multiple of 128, making this the lane-dense I/O slab; the reshape is free in XLA.
    x2 = x.reshape(B * S, E)

    def full_spec(shape):
        nd = len(shape)
        return pl.BlockSpec(shape, lambda *_: (0,) * nd)

    out = pl.pallas_call(
        vit_encoder_kernel,
        out_shape=jax.ShapeDtypeStruct((B * S, E), x.dtype),
        in_specs=[full_spec(x2.shape)] + [full_spec(p.shape) for p in params],
        out_specs=full_spec((B * S, E)),
        # No grid: the whole problem runs in one kernel step (per-step overhead removed).
        # At real ViT sizes, add a "parallel" token-tile grid axis (feeds v7x's 2 TCs)
        # and set pltpu.CompilerParams(vmem_limit_bytes=...) to budget v7x's 64 MiB VMEM.
    )(x2, *params)
    return out.reshape(B, S, E)


# ---------------- pure-JAX reference (mirrors the PyTorch forward) ----------------
def ref_forward(x, params):
    (ln1_g, ln1_b, w_in, b_in, w_out, b_out,
     ln2_g, ln2_b, w1, b1, w2, b2) = params

    def ln(v, g, b):
        m = jnp.mean(v, axis=-1, keepdims=True)
        var = jnp.mean((v - m) ** 2, axis=-1, keepdims=True)
        return (v - m) / jnp.sqrt(var + LN_EPS) * g + b

    B, S, E = x.shape
    xn = ln(x, ln1_g[0], ln1_b[0])
    qkv = xn @ w_in + b_in[0]
    q, k, v = qkv[..., :E], qkv[..., E:2 * E], qkv[..., 2 * E:]

    def split_heads(t):  # (B,S,E) -> (B,H,S,D)
        return t.reshape(B, S, HEADS, HEAD_DIM).transpose(0, 2, 1, 3)

    qh, kh, vh = split_heads(q), split_heads(k), split_heads(v)
    scores = jnp.einsum("bhqd,bhkd->bhqk", qh, kh) / jnp.sqrt(jnp.float32(HEAD_DIM))
    p = jax.nn.softmax(scores, axis=-1)
    attn = jnp.einsum("bhqk,bhkd->bhqd", p, vh).transpose(0, 2, 1, 3).reshape(B, S, E)
    x1 = x + (attn @ w_out + b_out[0])

    x1n = ln(x1, ln2_g[0], ln2_b[0])
    h1 = x1n @ w1 + b1[0]
    h1 = 0.5 * h1 * (1.0 + jax.lax.erf(h1 / jnp.sqrt(2.0)))
    return x1 + (h1 @ w2 + b2[0])


def make_params(key):
    ks = jax.random.split(key, 8)
    scale = 0.05
    # LayerNorm params: PyTorch defaults (gamma=1, beta=0), stored as (1, E)
    ln1_g = jnp.ones((1, EMB), jnp.float32)
    ln1_b = jnp.zeros((1, EMB), jnp.float32)
    ln2_g = jnp.ones((1, EMB), jnp.float32)
    ln2_b = jnp.zeros((1, EMB), jnp.float32)
    # nn.MultiheadAttention packed in_proj (3E, E) -> pre-transposed (E, 3E)
    w_in = scale * jax.random.normal(ks[0], (EMB, 3 * EMB), jnp.float32)
    b_in = scale * jax.random.normal(ks[1], (1, 3 * EMB), jnp.float32)
    # out_proj (E, E) -> pre-transposed
    w_out = scale * jax.random.normal(ks[2], (EMB, EMB), jnp.float32)
    b_out = scale * jax.random.normal(ks[3], (1, EMB), jnp.float32)
    # MLP linears (pre-transposed so kernel does x @ W)
    w1 = scale * jax.random.normal(ks[4], (EMB, MLP_SIZE), jnp.float32)
    b1 = scale * jax.random.normal(ks[5], (1, MLP_SIZE), jnp.float32)
    w2 = scale * jax.random.normal(ks[6], (MLP_SIZE, EMB), jnp.float32)
    b2 = scale * jax.random.normal(ks[7], (1, EMB), jnp.float32)
    return (ln1_g, ln1_b, w_in, b_in, w_out, b_out,
            ln2_g, ln2_b, w1, b1, w2, b2)


if __name__ == "__main__":
    key = jax.random.PRNGKey(0)
    k_x, k_p = jax.random.split(key)
    x = jax.random.normal(k_x, (BATCH, SEQ, EMB), jnp.float32)
    params = make_params(k_p)

    out = vit_encoder(x, params)
    out = jax.block_until_ready(out)

    ref = ref_forward(x, params)
    assert out.shape == (BATCH, SEQ, EMB)
    # Tolerance slightly looser than bit-exact fp32 because the softmax denominator uses
    # the EUP approximate reciprocal (pl.reciprocal(..., approx=True)).
    max_diff = jnp.max(jnp.abs(out - ref))
    assert jnp.allclose(out, ref, atol=2e-3, rtol=2e-3), f"max abs diff = {max_diff}"

    print("KERNEL_OK")
</pallas_src>

<mosaic_0001>
module attributes {stable_mosaic.version = 11 : i64} {
  func.func @vit_encoder_kernel(%arg0: memref<16x32xf32, #tpu.memory_space<vmem>>, %arg1: memref<1x32xf32, #tpu.memory_space<vmem>>, %arg2: memref<1x32xf32, #tpu.memory_space<vmem>>, %arg3: memref<32x96xf32, #tpu.memory_space<vmem>>, %arg4: memref<1x96xf32, #tpu.memory_space<vmem>>, %arg5: memref<32x32xf32, #tpu.memory_space<vmem>>, %arg6: memref<1x32xf32, #tpu.memory_space<vmem>>, %arg7: memref<1x32xf32, #tpu.memory_space<vmem>>, %arg8: memref<1x32xf32, #tpu.memory_space<vmem>>, %arg9: memref<32x32xf32, #tpu.memory_space<vmem>>, %arg10: memref<1x32xf32, #tpu.memory_space<vmem>>, %arg11: memref<32x32xf32, #tpu.memory_space<vmem>>, %arg12: memref<1x32xf32, #tpu.memory_space<vmem>>, %arg13: memref<16x32xf32, #tpu.memory_space<vmem>>) attributes {dimension_semantics = [], scalar_prefetch = 0 : i64, scratch_operands = 0 : i64, tpu.core_type = #tpu.core_type<tc>} {
    %c0 = arith.constant 0 : index
    %c0_0 = arith.constant 0 : index
    %0 = vector.load %arg0[%c0, %c0_0] : memref<16x32xf32, #tpu.memory_space<vmem>>, vector<16x32xf32>
    %c0_1 = arith.constant 0 : index
    %c0_2 = arith.constant 0 : index
    %1 = vector.load %arg1[%c0_1, %c0_2] : memref<1x32xf32, #tpu.memory_space<vmem>>, vector<1x32xf32>
    %2 = vector.shape_cast %1 : vector<1x32xf32> to vector<32xf32>
    %c0_3 = arith.constant 0 : index
    %c0_4 = arith.constant 0 : index
    %3 = vector.load %arg2[%c0_3, %c0_4] : memref<1x32xf32, #tpu.memory_space<vmem>>, vector<1x32xf32>
    %4 = vector.shape_cast %3 : vector<1x32xf32> to vector<32xf32>
    %cst = arith.constant dense<0.000000e+00> : vector<16xf32>
    %5 = vector.multi_reduction <add>, %0, %cst [1] : vector<16x32xf32> to vector<16xf32>
    %6 = vector.shape_cast %5 : vector<16xf32> to vector<16x1xf32>
    %cst_5 = arith.constant 3.200000e+01 : f32
    %7 = vector.broadcast %cst_5 : f32 to vector<16x1xf32>
    %8 = arith.divf %6, %7 : vector<16x1xf32>
    %9 = vector.broadcast %8 : vector<16x1xf32> to vector<16x32xf32>
    %10 = arith.subf %0, %9 : vector<16x32xf32>
    %11 = arith.mulf %10, %10 : vector<16x32xf32>
    %cst_6 = arith.constant dense<0.000000e+00> : vector<16xf32>
    %12 = vector.multi_reduction <add>, %11, %cst_6 [1] : vector<16x32xf32> to vector<16xf32>
    %13 = vector.shape_cast %12 : vector<16xf32> to vector<16x1xf32>
    %cst_7 = arith.constant 3.200000e+01 : f32
    %14 = vector.broadcast %cst_7 : f32 to vector<16x1xf32>
    %15 = arith.divf %13, %14 : vector<16x1xf32>
    %16 = vector.broadcast %8 : vector<16x1xf32> to vector<16x32xf32>
    %17 = arith.subf %0, %16 : vector<16x32xf32>
    %cst_8 = arith.constant 9.99999974E-6 : f32
    %18 = vector.broadcast %cst_8 : f32 to vector<16x1xf32>
    %19 = arith.addf %15, %18 : vector<16x1xf32>
    %20 = math.rsqrt %19 : vector<16x1xf32>
    %21 = vector.broadcast %20 : vector<16x1xf32> to vector<16x32xf32>
    %22 = arith.mulf %17, %21 : vector<16x32xf32>
    %23 = vector.shape_cast %2 : vector<32xf32> to vector<1x32xf32>
    %24 = vector.broadcast %23 : vector<1x32xf32> to vector<16x32xf32>
    %25 = arith.mulf %22, %24 : vector<16x32xf32>
    %26 = vector.shape_cast %4 : vector<32xf32> to vector<1x32xf32>
    %27 = vector.broadcast %26 : vector<1x32xf32> to vector<16x32xf32>
    %28 = arith.addf %25, %27 : vector<16x32xf32>
    %c0_9 = arith.constant 0 : index
    %c0_10 = arith.constant 0 : index
    %29 = vector.load %arg3[%c0_9, %c0_10] : memref<32x96xf32, #tpu.memory_space<vmem>>, vector<32x96xf32>
    %cst_11 = arith.constant dense<0.000000e+00> : vector<16x96xf32>
    %30 = tpu.matmul %28, %29, %cst_11 {dimension_numbers = #tpu.dot_dimension_numbers<[1], [0], [0], [1], [0, 0, 1, 1], [], []>} : vector<16x32xf32>, vector<32x96xf32>, vector<16x96xf32> -> vector<16x96xf32>
    %c0_12 = arith.constant 0 : index
    %c0_13 = arith.constant 0 : index
    %31 = vector.load %arg4[%c0_12, %c0_13] : memref<1x96xf32, #tpu.memory_space<vmem>>, vector<1x96xf32>
    %32 = vector.shape_cast %31 : vector<1x96xf32> to vector<96xf32>
    %33 = vector.shape_cast %32 : vector<96xf32> to vector<1x96xf32>
    %34 = vector.broadcast %33 : vector<1x96xf32> to vector<16x96xf32>
    %35 = arith.addf %30, %34 : vector<16x96xf32>
    %36 = vector.extract_strided_slice %35 {offsets = [0, 0], sizes = [16, 32], strides = [1, 1]} : vector<16x96xf32> to vector<16x32xf32>
    %37 = vector.shape_cast %36 : vector<16x32xf32> to vector<2x8x32xf32>
    %38 = vector.extract_strided_slice %35 {offsets = [0, 32], sizes = [16, 32], strides = [1, 1]} : vector<16x96xf32> to vector<16x32xf32>
    %39 = vector.shape_cast %38 : vector<16x32xf32> to vector<2x8x32xf32>
    %40 = vector.extract_strided_slice %35 {offsets = [0, 64], sizes = [16, 32], strides = [1, 1]} : vector<16x96xf32> to vector<16x32xf32>
    %41 = vector.shape_cast %40 : vector<16x32xf32> to vector<2x8x32xf32>
    %c0_14 = arith.constant 0 : index
    %c0_15 = arith.constant 0 : index
    %42 = vector.load %arg5[%c0_14, %c0_15] : memref<32x32xf32, #tpu.memory_space<vmem>>, vector<32x32xf32>
    %cst_16 = arith.constant 0.000000e+00 : f32
    %43 = vector.broadcast %cst_16 : f32 to vector<16x32xf32>
    %44 = vector.extract_strided_slice %37 {offsets = [0, 0, 0], sizes = [2, 8, 8], strides = [1, 1, 1]} : vector<2x8x32xf32> to vector<2x8x8xf32>
    %45 = vector.extract_strided_slice %39 {offsets = [0, 0, 0], sizes = [2, 8, 8], strides = [1, 1, 1]} : vector<2x8x32xf32> to vector<2x8x8xf32>
    %46 = vector.extract_strided_slice %41 {offsets = [0, 0, 0], sizes = [2, 8, 8], strides = [1, 1, 1]} : vector<2x8x32xf32> to vector<2x8x8xf32>
    %cst_17 = arith.constant dense<0.000000e+00> : vector<2x8x8xf32>
    %47 = tpu.matmul %44, %45, %cst_17 {dimension_numbers = #tpu.dot_dimension_numbers<[2], [2], [1], [1], [0, 0, 0, 1, 1, 1], [0], [0]>} : vector<2x8x8xf32>, vector<2x8x8xf32>, vector<2x8x8xf32> -> vector<2x8x8xf32>
    %cst_18 = arith.constant 0.353553385 : f32
    %48 = vector.broadcast %cst_18 : f32 to vector<2x8x8xf32>
    %49 = arith.mulf %47, %48 : vector<2x8x8xf32>
    %cst_19 = arith.constant dense<0xFF800000> : vector<2x8xf32>
    %50 = vector.multi_reduction <maximumf>, %49, %cst_19 [2] : vector<2x8x8xf32> to vector<2x8xf32>
    %51 = vector.shape_cast %50 : vector<2x8xf32> to vector<2x8x1xf32>
    %52 = vector.broadcast %51 : vector<2x8x1xf32> to vector<2x8x8xf32>
    %53 = arith.subf %49, %52 : vector<2x8x8xf32>
    %54 = math.exp %53 : vector<2x8x8xf32>
    %cst_20 = arith.constant dense<0.000000e+00> : vector<2x8xf32>
    %55 = vector.multi_reduction <add>, %54, %cst_20 [2] : vector<2x8x8xf32> to vector<2x8xf32>
    %56 = vector.shape_cast %55 : vector<2x8xf32> to vector<2x8x1xf32>
    %57 = tpu.reciprocal %56 {approx = true} : vector<2x8x1xf32> -> vector<2x8x1xf32>
    %58 = vector.broadcast %57 : vector<2x8x1xf32> to vector<2x8x8xf32>
    %59 = arith.mulf %54, %58 : vector<2x8x8xf32>
    %cst_21 = arith.constant dense<0.000000e+00> : vector<2x8x8xf32>
    %60 = tpu.matmul %59, %46, %cst_21 {dimension_numbers = #tpu.dot_dimension_numbers<[2], [1], [1], [2], [0, 0, 0, 1, 1, 2], [0], [0]>} : vector<2x8x8xf32>, vector<2x8x8xf32>, vector<2x8x8xf32> -> vector<2x8x8xf32>
    %61 = vector.shape_cast %60 : vector<2x8x8xf32> to vector<16x8xf32>
    %62 = vector.extract_strided_slice %42 {offsets = [0, 0], sizes = [8, 32], strides = [1, 1]} : vector<32x32xf32> to vector<8x32xf32>
    %cst_22 = arith.constant dense<0.000000e+00> : vector<16x32xf32>
    %63 = tpu.matmul %61, %62, %cst_22 {dimension_numbers = #tpu.dot_dimension_numbers<[1], [0], [0], [1], [0, 0, 1, 1], [], []>} : vector<16x8xf32>, vector<8x32xf32>, vector<16x32xf32> -> vector<16x32xf32>
    %64 = arith.addf %43, %63 : vector<16x32xf32>
    %65 = vector.extract_strided_slice %37 {offsets = [0, 0, 8], sizes = [2, 8, 8], strides = [1, 1, 1]} : vector<2x8x32xf32> to vector<2x8x8xf32>
    %66 = vector.extract_strided_slice %39 {offsets = [0, 0, 8], sizes = [2, 8, 8], strides = [1, 1, 1]} : vector<2x8x32xf32> to vector<2x8x8xf32>
    %67 = vector.extract_strided_slice %41 {offsets = [0, 0, 8], sizes = [2, 8, 8], strides = [1, 1, 1]} : vector<2x8x32xf32> to vector<2x8x8xf32>
    %cst_23 = arith.constant dense<0.000000e+00> : vector<2x8x8xf32>
    %68 = tpu.matmul %65, %66, %cst_23 {dimension_numbers = #tpu.dot_dimension_numbers<[2], [2], [1], [1], [0, 0, 0, 1, 1, 1], [0], [0]>} : vector<2x8x8xf32>, vector<2x8x8xf32>, vector<2x8x8xf32> -> vector<2x8x8xf32>
    %cst_24 = arith.constant 0.353553385 : f32
    %69 = vector.broadcast %cst_24 : f32 to vector<2x8x8xf32>
    %70 = arith.mulf %68, %69 : vector<2x8x8xf32>
    %cst_25 = arith.constant dense<0xFF800000> : vector<2x8xf32>
    %71 = vector.multi_reduction <maximumf>, %70, %cst_25 [2] : vector<2x8x8xf32> to vector<2x8xf32>
    %72 = vector.shape_cast %71 : vector<2x8xf32> to vector<2x8x1xf32>
    %73 = vector.broadcast %72 : vector<2x8x1xf32> to vector<2x8x8xf32>
    %74 = arith.subf %70, %73 : vector<2x8x8xf32>
    %75 = math.exp %74 : vector<2x8x8xf32>
    %cst_26 = arith.constant dense<0.000000e+00> : vector<2x8xf32>
    %76 = vector.multi_reduction <add>, %75, %cst_26 [2] : vector<2x8x8xf32> to vector<2x8xf32>
    %77 = vector.shape_cast %76 : vector<2x8xf32> to vector<2x8x1xf32>
    %78 = tpu.reciprocal %77 {approx = true} : vector<2x8x1xf32> -> vector<2x8x1xf32>
    %79 = vector.broadcast %78 : vector<2x8x1xf32> to vector<2x8x8xf32>
    %80 = arith.mulf %75, %79 : vector<2x8x8xf32>
    %cst_27 = arith.constant dense<0.000000e+00> : vector<2x8x8xf32>
    %81 = tpu.matmul %80, %67, %cst_27 {dimension_numbers = #tpu.dot_dimension_numbers<[2], [1], [1], [2], [0, 0, 0, 1, 1, 2], [0], [0]>} : vector<2x8x8xf32>, vector<2x8x8xf32>, vector<2x8x8xf32> -> vector<2x8x8xf32>
    %82 = vector.shape_cast %81 : vector<2x8x8xf32> to vector<16x8xf32>
    %83 = vector.extract_strided_slice %42 {offsets = [8, 0], sizes = [8, 32], strides = [1, 1]} : vector<32x32xf32> to vector<8x32xf32>
    %cst_28 = arith.constant dense<0.000000e+00> : vector<16x32xf32>
    %84 = tpu.matmul %82, %83, %cst_28 {dimension_numbers = #tpu.dot_dimension_numbers<[1], [0], [0], [1], [0, 0, 1, 1], [], []>} : vector<16x8xf32>, vector<8x32xf32>, vector<16x32xf32> -> vector<16x32xf32>
    %85 = arith.addf %64, %84 : vector<16x32xf32>
    %86 = vector.extract_strided_slice %37 {offsets = [0, 0, 16], sizes = [2, 8, 8], strides = [1, 1, 1]} : vector<2x8x32xf32> to vector<2x8x8xf32>
    %87 = vector.extract_strided_slice %39 {offsets = [0, 0, 16], sizes = [2, 8, 8], strides = [1, 1, 1]} : vector<2x8x32xf32> to vector<2x8x8xf32>
    %88 = vector.extract_strided_slice %41 {offsets = [0, 0, 16], sizes = [2, 8, 8], strides = [1, 1, 1]} : vector<2x8x32xf32> to vector<2x8x8xf32>
    %cst_29 = arith.constant dense<0.000000e+00> : vector<2x8x8xf32>
    %89 = tpu.matmul %86, %87, %cst_29 {dimension_numbers = #tpu.dot_dimension_numbers<[2], [2], [1], [1], [0, 0, 0, 1, 1, 1], [0], [0]>} : vector<2x8x8xf32>, vector<2x8x8xf32>, vector<2x8x8xf32> -> vector<2x8x8xf32>
    %cst_30 = arith.constant 0.353553385 : f32
    %90 = vector.broadcast %cst_30 : f32 to vector<2x8x8xf32>
    %91 = arith.mulf %89, %90 : vector<2x8x8xf32>
    %cst_31 = arith.constant dense<0xFF800000> : vector<2x8xf32>
    %92 = vector.multi_reduction <maximumf>, %91, %cst_31 [2] : vector<2x8x8xf32> to vector<2x8xf32>
    %93 = vector.shape_cast %92 : vector<2x8xf32> to vector<2x8x1xf32>
    %94 = vector.broadcast %93 : vector<2x8x1xf32> to vector<2x8x8xf32>
    %95 = arith.subf %91, %94 : vector<2x8x8xf32>
    %96 = math.exp %95 : vector<2x8x8xf32>
    %cst_32 = arith.constant dense<0.000000e+00> : vector<2x8xf32>
    %97 = vector.multi_reduction <add>, %96, %cst_32 [2] : vector<2x8x8xf32> to vector<2x8xf32>
    %98 = vector.shape_cast %97 : vector<2x8xf32> to vector<2x8x1xf32>
    %99 = tpu.reciprocal %98 {approx = true} : vector<2x8x1xf32> -> vector<2x8x1xf32>
    %100 = vector.broadcast %99 : vector<2x8x1xf32> to vector<2x8x8xf32>
    %101 = arith.mulf %96, %100 : vector<2x8x8xf32>
    %cst_33 = arith.constant dense<0.000000e+00> : vector<2x8x8xf32>
    %102 = tpu.matmul %101, %88, %cst_33 {dimension_numbers = #tpu.dot_dimension_numbers<[2], [1], [1], [2], [0, 0, 0, 1, 1, 2], [0], [0]>} : vector<2x8x8xf32>, vector<2x8x8xf32>, vector<2x8x8xf32> -> vector<2x8x8xf32>
    %103 = vector.shape_cast %102 : vector<2x8x8xf32> to vector<16x8xf32>
    %104 = vector.extract_strided_slice %42 {offsets = [16, 0], sizes = [8, 32], strides = [1, 1]} : vector<32x32xf32> to vector<8x32xf32>
    %cst_34 = arith.constant dense<0.000000e+00> : vector<16x32xf32>
    %105 = tpu.matmul %103, %104, %cst_34 {dimension_numbers = #tpu.dot_dimension_numbers<[1], [0], [0], [1], [0, 0, 1, 1], [], []>} : vector<16x8xf32>, vector<8x32xf32>, vector<16x32xf32> -> vector<16x32xf32>
    %106 = arith.addf %85, %105 : vector<16x32xf32>
    %107 = vector.extract_strided_slice %37 {offsets = [0, 0, 24], sizes = [2, 8, 8], strides = [1, 1, 1]} : vector<2x8x32xf32> to vector<2x8x8xf32>
    %108 = vector.extract_strided_slice %39 {offsets = [0, 0, 24], sizes = [2, 8, 8], strides = [1, 1, 1]} : vector<2x8x32xf32> to vector<2x8x8xf32>
    %109 = vector.extract_strided_slice %41 {offsets = [0, 0, 24], sizes = [2, 8, 8], strides = [1, 1, 1]} : vector<2x8x32xf32> to vector<2x8x8xf32>
    %cst_35 = arith.constant dense<0.000000e+00> : vector<2x8x8xf32>
    %110 = tpu.matmul %107, %108, %cst_35 {dimension_numbers = #tpu.dot_dimension_numbers<[2], [2], [1], [1], [0, 0, 0, 1, 1, 1], [0], [0]>} : vector<2x8x8xf32>, vector<2x8x8xf32>, vector<2x8x8xf32> -> vector<2x8x8xf32>
    %cst_36 = arith.constant 0.353553385 : f32
    %111 = vector.broadcast %cst_36 : f32 to vector<2x8x8xf32>
    %112 = arith.mulf %110, %111 : vector<2x8x8xf32>
    %cst_37 = arith.constant dense<0xFF800000> : vector<2x8xf32>
    %113 = vector.multi_reduction <maximumf>, %112, %cst_37 [2] : vector<2x8x8xf32> to vector<2x8xf32>
    %114 = vector.shape_cast %113 : vector<2x8xf32> to vector<2x8x1xf32>
    %115 = vector.broadcast %114 : vector<2x8x1xf32> to vector<2x8x8xf32>
    %116 = arith.subf %112, %115 : vector<2x8x8xf32>
    %117 = math.exp %116 : vector<2x8x8xf32>
    %cst_38 = arith.constant dense<0.000000e+00> : vector<2x8xf32>
    %118 = vector.multi_reduction <add>, %117, %cst_38 [2] : vector<2x8x8xf32> to vector<2x8xf32>
    %119 = vector.shape_cast %118 : vector<2x8xf32> to vector<2x8x1xf32>
    %120 = tpu.reciprocal %119 {approx = true} : vector<2x8x1xf32> -> vector<2x8x1xf32>
    %121 = vector.broadcast %120 : vector<2x8x1xf32> to vector<2x8x8xf32>
    %122 = arith.mulf %117, %121 : vector<2x8x8xf32>
    %cst_39 = arith.constant dense<0.000000e+00> : vector<2x8x8xf32>
    %123 = tpu.matmul %122, %109, %cst_39 {dimension_numbers = #tpu.dot_dimension_numbers<[2], [1], [1], [2], [0, 0, 0, 1, 1, 2], [0], [0]>} : vector<2x8x8xf32>, vector<2x8x8xf32>, vector<2x8x8xf32> -> vector<2x8x8xf32>
    %124 = vector.shape_cast %123 : vector<2x8x8xf32> to vector<16x8xf32>
    %125 = vector.extract_strided_slice %42 {offsets = [24, 0], sizes = [8, 32], strides = [1, 1]} : vector<32x32xf32> to vector<8x32xf32>
    %cst_40 = arith.constant dense<0.000000e+00> : vector<16x32xf32>
    %126 = tpu.matmul %124, %125, %cst_40 {dimension_numbers = #tpu.dot_dimension_numbers<[1], [0], [0], [1], [0, 0, 1, 1], [], []>} : vector<16x8xf32>, vector<8x32xf32>, vector<16x32xf32> -> vector<16x32xf32>
    %127 = arith.addf %106, %126 : vector<16x32xf32>
    %128 = arith.addf %0, %127 : vector<16x32xf32>
    %c0_41 = arith.constant 0 : index
    %c0_42 = arith.constant 0 : index
    %129 = vector.load %arg6[%c0_41, %c0_42] : memref<1x32xf32, #tpu.memory_space<vmem>>, vector<1x32xf32>
    %130 = vector.shape_cast %129 : vector<1x32xf32> to vector<32xf32>
    %131 = vector.shape_cast %130 : vector<32xf32> to vector<1x32xf32>
    %132 = vector.broadcast %131 : vector<1x32xf32> to vector<16x32xf32>
    %133 = arith.addf %128, %132 : vector<16x32xf32>
    %c0_43 = arith.constant 0 : index
    %c0_44 = arith.constant 0 : index
    %134 = vector.load %arg7[%c0_43, %c0_44] : memref<1x32xf32, #tpu.memory_space<vmem>>, vector<1x32xf32>
    %135 = vector.shape_cast %134 : vector<1x32xf32> to vector<32xf32>
    %c0_45 = arith.constant 0 : index
    %c0_46 = arith.constant 0 : index
    %136 = vector.load %arg8[%c0_45, %c0_46] : memref<1x32xf32, #tpu.memory_space<vmem>>, vector<1x32xf32>
    %137 = vector.shape_cast %136 : vector<1x32xf32> to vector<32xf32>
    %cst_47 = arith.constant dense<0.000000e+00> : vector<16xf32>
    %138 = vector.multi_reduction <add>, %133, %cst_47 [1] : vector<16x32xf32> to vector<16xf32>
    %139 = vector.shape_cast %138 : vector<16xf32> to vector<16x1xf32>
    %cst_48 = arith.constant 3.200000e+01 : f32
    %140 = vector.broadcast %cst_48 : f32 to vector<16x1xf32>
    %141 = arith.divf %139, %140 : vector<16x1xf32>
    %142 = vector.broadcast %141 : vector<16x1xf32> to vector<16x32xf32>
    %143 = arith.subf %133, %142 : vector<16x32xf32>
    %144 = arith.mulf %143, %143 : vector<16x32xf32>
    %cst_49 = arith.constant dense<0.000000e+00> : vector<16xf32>
    %145 = vector.multi_reduction <add>, %144, %cst_49 [1] : vector<16x32xf32> to vector<16xf32>
    %146 = vector.shape_cast %145 : vector<16xf32> to vector<16x1xf32>
    %cst_50 = arith.constant 3.200000e+01 : f32
    %147 = vector.broadcast %cst_50 : f32 to vector<16x1xf32>
    %148 = arith.divf %146, %147 : vector<16x1xf32>
    %149 = vector.broadcast %141 : vector<16x1xf32> to vector<16x32xf32>
    %150 = arith.subf %133, %149 : vector<16x32xf32>
    %cst_51 = arith.constant 9.99999974E-6 : f32
    %151 = vector.broadcast %cst_51 : f32 to vector<16x1xf32>
    %152 = arith.addf %148, %151 : vector<16x1xf32>
    %153 = math.rsqrt %152 : vector<16x1xf32>
    %154 = vector.broadcast %153 : vector<16x1xf32> to vector<16x32xf32>
    %155 = arith.mulf %150, %154 : vector<16x32xf32>
    %156 = vector.shape_cast %135 : vector<32xf32> to vector<1x32xf32>
    %157 = vector.broadcast %156 : vector<1x32xf32> to vector<16x32xf32>
    %158 = arith.mulf %155, %157 : vector<16x32xf32>
    %159 = vector.shape_cast %137 : vector<32xf32> to vector<1x32xf32>
    %160 = vector.broadcast %159 : vector<1x32xf32> to vector<16x32xf32>
    %161 = arith.addf %158, %160 : vector<16x32xf32>
    %c0_52 = arith.constant 0 : index
    %c0_53 = arith.constant 0 : index
    %162 = vector.load %arg9[%c0_52, %c0_53] : memref<32x32xf32, #tpu.memory_space<vmem>>, vector<32x32xf32>
    %cst_54 = arith.constant dense<0.000000e+00> : vector<16x32xf32>
    %163 = tpu.matmul %161, %162, %cst_54 {dimension_numbers = #tpu.dot_dimension_numbers<[1], [0], [0], [1], [0, 0, 1, 1], [], []>} : vector<16x32xf32>, vector<32x32xf32>, vector<16x32xf32> -> vector<16x32xf32>
    %c0_55 = arith.constant 0 : index
    %c0_56 = arith.constant 0 : index
    %164 = vector.load %arg10[%c0_55, %c0_56] : memref<1x32xf32, #tpu.memory_space<vmem>>, vector<1x32xf32>
    %165 = vector.shape_cast %164 : vector<1x32xf32> to vector<32xf32>
    %166 = vector.shape_cast %165 : vector<32xf32> to vector<1x32xf32>
    %167 = vector.broadcast %166 : vector<1x32xf32> to vector<16x32xf32>
    %168 = arith.addf %163, %167 : vector<16x32xf32>
    %cst_57 = arith.constant 5.000000e-01 : f32
    %169 = vector.broadcast %cst_57 : f32 to vector<16x32xf32>
    %170 = arith.mulf %169, %168 : vector<16x32xf32>
    %cst_58 = arith.constant 2.000000e+00 : f32
    %171 = math.sqrt %cst_58 : f32
    %cst_59 = arith.constant 1.000000e+00 : f32
    %172 = arith.divf %cst_59, %171 : f32
    %173 = vector.broadcast %172 : f32 to vector<16x32xf32>
    %174 = arith.mulf %168, %173 : vector<16x32xf32>
    %175 = math.erf %174 : vector<16x32xf32>
    %cst_60 = arith.constant 1.000000e+00 : f32
    %176 = vector.broadcast %cst_60 : f32 to vector<16x32xf32>
    %177 = arith.addf %176, %175 : vector<16x32xf32>
    %178 = arith.mulf %170, %177 : vector<16x32xf32>
    %c0_61 = arith.constant 0 : index
    %c0_62 = arith.constant 0 : index
    %179 = vector.load %arg11[%c0_61, %c0_62] : memref<32x32xf32, #tpu.memory_space<vmem>>, vector<32x32xf32>
    %cst_63 = arith.constant dense<0.000000e+00> : vector<16x32xf32>
    %180 = tpu.matmul %178, %179, %cst_63 {dimension_numbers = #tpu.dot_dimension_numbers<[1], [0], [0], [1], [0, 0, 1, 1], [], []>} : vector<16x32xf32>, vector<32x32xf32>, vector<16x32xf32> -> vector<16x32xf32>
    %c0_64 = arith.constant 0 : index
    %c0_65 = arith.constant 0 : index
    %181 = vector.load %arg12[%c0_64, %c0_65] : memref<1x32xf32, #tpu.memory_space<vmem>>, vector<1x32xf32>
    %182 = vector.shape_cast %181 : vector<1x32xf32> to vector<32xf32>
    %183 = vector.shape_cast %182 : vector<32xf32> to vector<1x32xf32>
    %184 = vector.broadcast %183 : vector<1x32xf32> to vector<16x32xf32>
    %185 = arith.addf %180, %184 : vector<16x32xf32>
    %186 = arith.addf %133, %185 : vector<16x32xf32>
    %c0_66 = arith.constant 0 : index
    %c0_67 = arith.constant 0 : index
    %187 = vector.load %arg13[%c0_66, %c0_67] : memref<16x32xf32, #tpu.memory_space<vmem>>, vector<16x32xf32>
    tpu.vector_store %arg13[%c0_66, %c0_67], %186 {strides = array<i32>} : memref<16x32xf32, #tpu.memory_space<vmem>>, vector<16x32xf32>,
    return
  }
}

</mosaic_0001>

<llo_original>
// kernel: tpu_custom_call.1
$region0: #{tpu_custom_call.1}
  #allocation0 [shape = 'u32[]', space=smem, size = 0x4, offset = 0x4, fixed_abs, tag = 'smem constant byte address 0x4 - core index']
  #allocation1 [shape = 'u32[144,128]{1,0:T(1,128)}', space=vmem, size = 0x12000, scoped, tag = 'internal scratch']
  %s0 = inlined_call_operand.hbm [shape: f32[16,32], index: 0, kind: input, shape index: {}]
  %s1 = inlined_call_operand.vmem [shape: f32[1,32], index: 1, kind: input, shape index: {}]
  %s2 = inlined_call_operand.vmem [shape: f32[1,32], index: 2, kind: input, shape index: {}]
  %s3 = inlined_call_operand.hbm [shape: f32[32,96], index: 3, kind: input, shape index: {}]
  %s4 = inlined_call_operand.vmem [shape: f32[1,96], index: 4, kind: input, shape index: {}]
  %s5 = inlined_call_operand.hbm [shape: f32[32,32], index: 5, kind: input, shape index: {}]
  %s6 = inlined_call_operand.vmem [shape: f32[1,32], index: 6, kind: input, shape index: {}]
  %s7 = inlined_call_operand.vmem [shape: f32[1,32], index: 7, kind: input, shape index: {}]
  %s8 = inlined_call_operand.vmem [shape: f32[1,32], index: 8, kind: input, shape index: {}]
  %s9 = inlined_call_operand.hbm [shape: f32[32,32], index: 9, kind: input, shape index: {}]
  %s10 = inlined_call_operand.vmem [shape: f32[1,32], index: 10, kind: input, shape index: {}]
  %s11 = inlined_call_operand.hbm [shape: f32[32,32], index: 11, kind: input, shape index: {}]
  %s12 = inlined_call_operand.vmem [shape: f32[1,32], index: 12, kind: input, shape index: {}]
  %s13 = inlined_call_operand.hbm [shape: f32[16,32], index: 13, kind: output, shape index: {}]
  %s14 = sld [smem:[#allocation0]]
  $region82: #{tpu_custom_call.1} parent=0
    _
  %s16 = ssub.s32 1, %s14
  %s17 = scalar_select 0, %s16, %s14
  $region1: #{tpu_custom_call.1} parent=0
    #allocation2 [shape = 'u8[8192]{0}', space=vmem, size = 0x2000, scoped, tag = 'input window, operand 0, single buffered']
    #allocation3 [shape = 's32[1]{0}', space=sflag, size = 0x4, scoped, tag = 'scoped memory for tpu_custom_call.1']
    #allocation4 [shape = 's32[1]{0}', space=sflag, size = 0x4, scoped, tag = 'scoped memory for tpu_custom_call.1']
    #allocation5 [shape = 'u8[16384]{0}', space=vmem, size = 0x4000, scoped, tag = 'input window, operand 3, single buffered']
    #allocation6 [shape = 's32[1]{0}', space=sflag, size = 0x4, scoped, tag = 'scoped memory for tpu_custom_call.1']
    #allocation7 [shape = 'u8[16384]{0}', space=vmem, size = 0x4000, scoped, tag = 'input window, operand 5, single buffered']
    #allocation8 [shape = 'u8[16384]{0}', space=vmem, size = 0x4000, scoped, tag = 'input window, operand 9, single buffered']
    #allocation9 [shape = 's32[1]{0}', space=sflag, size = 0x4, scoped, tag = 'scoped memory for tpu_custom_call.1']
    #allocation10 [shape = 'u8[16384]{0}', space=vmem, size = 0x4000, scoped, tag = 'input window, operand 11, single buffered']
    #allocation11 [shape = 'u8[8192]{0}', space=vmem, size = 0x2000, scoped, tag = 'output window, operand 0, single buffered']
    %18 = vsyncpa [#allocation3], 0
    %19 = vsyncpa [#allocation6], 0
    %20 = vsyncpa [#allocation9], 0
    %21 = vsyncpa [#allocation4], 0
    // Predicated region
    $region2: #{tpu_custom_call.1} parent=1 // pred_check
      _
    $region3: #{tpu_custom_call.1} parent=1 // pred_check_branch
      %23 = sbr.rel (0) target = $region5
    $region4: #{tpu_custom_call.1} parent=1 // pred_region
      %s25 = ssub.s32 256, 256
      %26 = vsyncadd [#allocation3], %s25
      %s27 = sshll.u32 [#allocation2], 4
      %s28 = int_to_ptr.vmem [resolvable:$true] %s27
      %33 = dma.hbm_to_vmem [thread:$0]  %s0, 256, %s28, [#allocation3], 128, 128, 8
    $region5: #{tpu_custom_call.1} parent=1 // pred_fallthru
      _
    // Predicated region
    $region6: #{tpu_custom_call.1} parent=1 // pred_check
      _
    $region7: #{tpu_custom_call.1} parent=1 // pred_check_branch
      %35 = sbr.rel (0) target = $region9
    $region8: #{tpu_custom_call.1} parent=1 // pred_region
      _
    $region9: #{tpu_custom_call.1} parent=1 // pred_fallthru
      _
    // Predicated region
    $region10: #{tpu_custom_call.1} parent=1 // pred_check
      _
    $region11: #{tpu_custom_call.1} parent=1 // pred_check_branch
      %37 = sbr.rel (0) target = $region13
    $region12: #{tpu_custom_call.1} parent=1 // pred_region
      _
    $region13: #{tpu_custom_call.1} parent=1 // pred_fallthru
      _
    // Predicated region
    $region14: #{tpu_custom_call.1} parent=1 // pred_check
      _
    $region15: #{tpu_custom_call.1} parent=1 // pred_check_branch
      %39 = sbr.rel (0) target = $region17
    $region16: #{tpu_custom_call.1} parent=1 // pred_region
      %s41 = ssub.s32 512, 512
      %42 = vsyncadd [#allocation6], %s41
      %s43 = sshll.u32 [#allocation5], 4
      %s44 = int_to_ptr.vmem [resolvable:$true] %s43
      %49 = dma.hbm_to_vmem [thread:$0]  %s3, 512, %s44, [#allocation6], 128, 128, 8
    $region17: #{tpu_custom_call.1} parent=1 // pred_fallthru
      _
    // Predicated region
    $region18: #{tpu_custom_call.1} parent=1 // pred_check
      _
    $region19: #{tpu_custom_call.1} parent=1 // pred_check_branch
      %51 = sbr.rel (0) target = $region21
    $region20: #{tpu_custom_call.1} parent=1 // pred_region
      _
    $region21: #{tpu_custom_call.1} parent=1 // pred_fallthru
      _
    // Predicated region
    $region22: #{tpu_custom_call.1} parent=1 // pred_check
      _
    $region23: #{tpu_custom_call.1} parent=1 // pred_check_branch
      %53 = sbr.rel (0) target = $region25
    $region24: #{tpu_custom_call.1} parent=1 // pred_region
      %s55 = ssub.s32 512, 512
      %56 = vsyncadd [#allocation6], %s55
      %s57 = sshll.u32 [#allocation7], 4
      %s58 = int_to_ptr.vmem [resolvable:$true] %s57
      %63 = dma.hbm_to_vmem [thread:$0]  %s5, 512, %s58, [#allocation6], 128, 128, 8
    $region25: #{tpu_custom_call.1} parent=1 // pred_fallthru
      _
    // Predicated region
    $region26: #{tpu_custom_call.1} parent=1 // pred_check
      _
    $region27: #{tpu_custom_call.1} parent=1 // pred_check_branch
      %65 = sbr.rel (0) target = $region29
    $region28: #{tpu_custom_call.1} parent=1 // pred_region
      _
    $region29: #{tpu_custom_call.1} parent=1 // pred_fallthru
      _
    // Predicated region
    $region30: #{tpu_custom_call.1} parent=1 // pred_check
      _
    $region31: #{tpu_custom_call.1} parent=1 // pred_check_branch
      %67 = sbr.rel (0) target = $region33
    $region32: #{tpu_custom_call.1} parent=1 // pred_region
      _
    $region33: #{tpu_custom_call.1} parent=1 // pred_fallthru
      _
    // Predicated region
    $region34: #{tpu_custom_call.1} parent=1 // pred_check
      _
    $region35: #{tpu_custom_call.1} parent=1 // pred_check_branch
      %69 = sbr.rel (0) target = $region37
    $region36: #{tpu_custom_call.1} parent=1 // pred_region
      _
    $region37: #{tpu_custom_call.1} parent=1 // pred_fallthru
      _
    // Predicated region
    $region38: #{tpu_custom_call.1} parent=1 // pred_check
      _
    $region39: #{tpu_custom_call.1} parent=1 // pred_check_branch
      %71 = sbr.rel (0) target = $region41
    $region40: #{tpu_custom_call.1} parent=1 // pred_region
      %s73 = ssub.s32 512, 512
      %74 = vsyncadd [#allocation9], %s73
      %s75 = sshll.u32 [#allocation8], 4
      %s76 = int_to_ptr.vmem [resolvable:$true] %s75
      %81 = dma.hbm_to_vmem [thread:$0]  %s9, 512, %s76, [#allocation9], 128, 128, 8
    $region41: #{tpu_custom_call.1} parent=1 // pred_fallthru
      _
    // Predicated region
    $region42: #{tpu_custom_call.1} parent=1 // pred_check
      _
    $region43: #{tpu_custom_call.1} parent=1 // pred_check_branch
      %83 = sbr.rel (0) target = $region45
    $region44: #{tpu_custom_call.1} parent=1 // pred_region
      _
    $region45: #{tpu_custom_call.1} parent=1 // pred_fallthru
      _
    // Predicated region
    $region46: #{tpu_custom_call.1} parent=1 // pred_check
      _
    $region47: #{tpu_custom_call.1} parent=1 // pred_check_branch
      %85 = sbr.rel (0) target = $region49
    $region48: #{tpu_custom_call.1} parent=1 // pred_region
      %s87 = ssub.s32 512, 512
      %88 = vsyncadd [#allocation9], %s87
      %s89 = sshll.u32 [#allocation10], 4
      %s90 = int_to_ptr.vmem [resolvable:$true] %s89
      %95 = dma.hbm_to_vmem [thread:$0]  %s11, 512, %s90, [#allocation9], 128, 128, 8
    $region49: #{tpu_custom_call.1} parent=1 // pred_fallthru
      _
    // Predicated region
    $region50: #{tpu_custom_call.1} parent=1 // pred_check
      _
    $region51: #{tpu_custom_call.1} parent=1 // pred_check_branch
      %97 = sbr.rel (0) target = $region53
    $region52: #{tpu_custom_call.1} parent=1 // pred_region
      _
    $region53: #{tpu_custom_call.1} parent=1 // pred_fallthru
      _
    // Predicated region
    $region54: #{tpu_custom_call.1} parent=1 // pred_check
      _
    $region55: #{tpu_custom_call.1} parent=1 // pred_check_branch
      %99 = sbr.rel (0) target = $region57
    $region56: #{tpu_custom_call.1} parent=1 // pred_region
      %100 = dma.done [#allocation3], 256
    $region57: #{tpu_custom_call.1} parent=1 // pred_fallthru
      _
    // Predicated region
    $region58: #{tpu_custom_call.1} parent=1 // pred_check
      _
    $region59: #{tpu_custom_call.1} parent=1 // pred_check_branch
      %102 = sbr.rel (0) target = $region61
    $region60: #{tpu_custom_call.1} parent=1 // pred_region
      %103 = dma.done [#allocation6], 512
    $region61: #{tpu_custom_call.1} parent=1 // pred_fallthru
      _
    // Predicated region
    $region62: #{tpu_custom_call.1} parent=1 // pred_check
      _
    $region63: #{tpu_custom_call.1} parent=1 // pred_check_branch
      %105 = sbr.rel (0) target = $region65
    $region64: #{tpu_custom_call.1} parent=1 // pred_region
      %106 = dma.done [#allocation6], 512
    $region65: #{tpu_custom_call.1} parent=1 // pred_fallthru
      _
    // Predicated region
    $region66: #{tpu_custom_call.1} parent=1 // pred_check
      _
    $region67: #{tpu_custom_call.1} parent=1 // pred_check_branch
      %108 = sbr.rel (0) target = $region69
    $region68: #{tpu_custom_call.1} parent=1 // pred_region
      %109 = dma.done [#allocation9], 512
    $region69: #{tpu_custom_call.1} parent=1 // pred_fallthru
      _
    // Predicated region
    $region70: #{tpu_custom_call.1} parent=1 // pred_check
      _
    $region71: #{tpu_custom_call.1} parent=1 // pred_check_branch
      %111 = sbr.rel (0) target = $region73
    $region72: #{tpu_custom_call.1} parent=1 // pred_region
      %112 = dma.done [#allocation9], 512
    $region73: #{tpu_custom_call.1} parent=1 // pred_fallthru
      _
    %v113 = vld [vmem:[#allocation2] sm:$0xff]
    %v114 = vld [vmem:[#allocation2 + $0x8] sm:$0xff]
    %v115 = vld [vmem:[%s1] sm:$0x1]
    %v116 = vld [vmem:[%s2] sm:$0x1]
    %vm117 = vcmask 261120
    %v118 = vsel %vm117, %v113, 0.0
    %119 = vadd.xlane.f32.xlu0 %v118
    %v120 = vpop.xlane.xlu0 %119
    %v121 = vsel %vm117, %v114, 0.0
    %122 = vadd.xlane.f32.xlu0 %v121
    %v123 = vpop.xlane.xlu0 %122
    %v124 = vrcp.pop 32.0
    %v125 = vmul.f32 %v120, %v124
    %v126 = vmul.f32 %v123, %v124
    %v127 = vsub.f32 %v113, %v125
    %v128 = vsub.f32 %v114, %v126
    %v129 = vmul.f32 %v127, %v127
    %v130 = vmul.f32 %v128, %v128
    %v131 = vsel %vm117, %v129, 0.0
    %132 = vadd.xlane.f32.xlu0 %v131
    %v133 = vpop.xlane.xlu0 %132
    %v134 = vsel %vm117, %v130, 0.0
    %135 = vadd.xlane.f32.xlu0 %v134
    %v136 = vpop.xlane.xlu0 %135
    %v137 = vmul.f32 %v133, %v124
    %v138 = vmul.f32 %v136, %v124
    %v139 = vadd.f32 %v137, 1e-05
    %v140 = vadd.f32 %v138, 1e-05
    %v141 = vrsqrt.pop %v139
    %v142 = vrsqrt.pop %v140
    %v143 = vmul.f32 %v127, %v141
    %v144 = vmul.f32 %v128, %v142
    %v146 = vlaneseq
    %v147 = vshrl.u32 %v146, 7
    %v148 = vsub.s32 0, %v147
    %v149 = vrot.slane %v115, %v148
    %v151 = vmul.f32 %v143, %v149
    %v152 = vmul.f32 %v144, %v149
    %v154 = vlaneseq
    %v155 = vshrl.u32 %v154, 7
    %v156 = vsub.s32 0, %v155
    %v157 = vrot.slane %v116, %v156
    %v159 = vadd.f32 %v151, %v157
    %v160 = vadd.f32 %v152, %v157
    %v161 = vld [vmem:[#allocation5] sm:$0xff]
    %v162 = vld [vmem:[#allocation5 + $0x8] sm:$0xff]
    %v163 = vld [vmem:[#allocation5 + $0x10] sm:$0xff]
    %v164 = vld [vmem:[#allocation5 + $0x18] sm:$0xff]
    %v165 = vld [vmem:[%s4] sm:$0x1]
    %v167 = vlaneseq
    %v168 = vshrl.u32 %v167, 7
    %v169 = vsub.s32 0, %v168
    %v170 = vrot.slane %v165, %v169
    %v173 = vsel %vm117, %v159, 0
    %v176 = vsel %vm117, %v160, 0
    %178 = vmatprep.subr.mxu0 0.0
    %179 = vmatpush1.msra.mxu0 0.0
    %180 = vmatprep.subr.mxu0 0.0
    %181 = vmatpush1.msra.mxu0 0.0
    %182 = vmatprep.subr.mxu0 0.0
    %183 = vmatpush1.msra.mxu0 0.0
    %184 = vmatprep.subr.mxu0 0.0
    %185 = vmatpush1.msra.mxu0 0.0
    %186 = vmatprep.subr.mxu0 0.0
    %187 = vmatpush1.msra.mxu0 0.0
    %188 = vmatprep.subr.mxu0 0.0
    %189 = vmatpush1.msra.mxu0 0.0
    %190 = vmatprep.subr.mxu0 0.0
    %191 = vmatpush1.msra.mxu0 0.0
    %192 = vmatprep.subr.mxu0 0.0
    %193 = vmatpush1.msra.mxu0 0.0
    %194 = vmatprep.subr.mxu0 0.0
    %195 = vmatpush1.msra.mxu0 0.0
    %196 = vmatprep.subr.mxu0 0.0
    %197 = vmatpush1.msra.mxu0 0.0
    %198 = vmatprep.subr.mxu0 0.0
    %199 = vmatpush1.msra.mxu0 0.0
    %200 = vmatprep.subr.mxu0 0.0
    %201 = vmatpush1.msra.mxu0 0.0
    %202 = vmatprep.subr.mxu0 0.0
    %203 = vmatpush1.msra.mxu0 %v164
    %204 = vmatprep.subr.mxu0 0.0
    %205 = vmatpush1.msra.mxu0 %v163
    %206 = vmatprep.subr.mxu0 0.0
    %207 = vmatpush1.msra.mxu0 %v162
    %208 = vmatprep.subr.mxu0 0.0
    %209 = vmatpush1.msra.mxu0 %v161
    %210 = vmatprep.subr.mxu0 0.0
    %211 = vmatpush2.msra.mxu0 0.0
    %212 = vmatprep.subr.mxu0 0.0
    %213 = vmatpush2.msra.mxu0 0.0
    %214 = vmatprep.subr.mxu0 0.0
    %215 = vmatpush2.msra.mxu0 0.0
    %216 = vmatprep.subr.mxu0 0.0
    %217 = vmatpush2.msra.mxu0 0.0
    %218 = vmatprep.subr.mxu0 0.0
    %219 = vmatpush2.msra.mxu0 0.0
    %220 = vmatprep.subr.mxu0 0.0
    %221 = vmatpush2.msra.mxu0 0.0
    %222 = vmatprep.subr.mxu0 0.0
    %223 = vmatpush2.msra.mxu0 0.0
    %224 = vmatprep.subr.mxu0 0.0
    %225 = vmatpush2.msra.mxu0 0.0
    %226 = vmatprep.subr.mxu0 0.0
    %227 = vmatpush2.msra.mxu0 0.0
    %228 = vmatprep.subr.mxu0 0.0
    %229 = vmatpush2.msra.mxu0 0.0
    %230 = vmatprep.subr.mxu0 0.0
    %231 = vmatpush2.msra.mxu0 0.0
    %232 = vmatprep.subr.mxu0 0.0
    %233 = vmatpush2.msra.mxu0 0.0
    %234 = vmatprep.subr.mxu0 0.0
    %235 = vmatpush2.msra.mxu0 0.0
    %236 = vmatprep.subr.mxu0 0.0
    %237 = vmatpush2.msra.mxu0 0.0
    %238 = vmatprep.subr.mxu0 0.0
    %239 = vmatpush2.msra.mxu0 0.0
    %240 = vmatprep.subr.mxu0 0.0
    %241 = vmatpush2.msra.mxu0 0.0
    %242 = vmatprep.mubr.f32.mxu0 0.0
    %243 = vmatmul.mubr.f32.gmra.mxu0 %v173
    %v244 = vpop.f32.mrf.mxu0
    %v245 = vadd.f32 %v170, %v244
    %v246 = vpop.f32.mrf.mxu0
    %247 = vmatprep.mubr.f32.mxu0 0.0
    %248 = vmatmul.mubr.f32.gmra.mxu0 %v176
    %v249 = vpop.f32.mrf.mxu0
    %v250 = vadd.f32 %v170, %v249
    %v251 = vpop.f32.mrf.mxu0
    %252 = vdwg.mxu0
    %v253 = vld [vmem:[#allocation7] sm:$0xff]
    %v254 = vld [vmem:[#allocation7 + $0x8] sm:$0xff]
    %v255 = vld [vmem:[#allocation7 + $0x10] sm:$0xff]
    %v256 = vld [vmem:[#allocation7 + $0x18] sm:$0xff]
    %258 = vrot.lane.b32.xlu0 %v245, 96
    %v259 = vpop.permute.xlu0 %258
    %vm260 = vcmask 64512
    %v261 = vsel %vm260, %v245, 0
    %v263 = vsel %vm260, %v259, 0
    %265 = vmatprep.subr.mxu0 0.0
    %266 = vmatpush1.xpose.msra.mxu0 0.0
    %267 = vmatprep.subr.mxu0 0.0
    %268 = vmatpush1.xpose.msra.mxu0 0.0
    %269 = vmatprep.subr.mxu0 0.0
    %270 = vmatpush1.xpose.msra.mxu0 0.0
    %271 = vmatprep.subr.mxu0 0.0
    %272 = vmatpush1.xpose.msra.mxu0 0.0
    %273 = vmatprep.subr.mxu0 0.0
    %274 = vmatpush1.xpose.msra.mxu0 0.0
    %275 = vmatprep.subr.mxu0 0.0
    %276 = vmatpush1.xpose.msra.mxu0 0.0
    %277 = vmatprep.subr.mxu0 0.0
    %278 = vmatpush1.xpose.msra.mxu0 0.0
    %279 = vmatprep.subr.mxu0 0.0
    %280 = vmatpush1.xpose.msra.mxu0 0.0
    %281 = vmatprep.subr.mxu0 0.0
    %282 = vmatpush1.xpose.msra.mxu0 0.0
    %283 = vmatprep.subr.mxu0 0.0
    %284 = vmatpush1.xpose.msra.mxu0 0.0
    %285 = vmatprep.subr.mxu0 0.0
    %286 = vmatpush1.xpose.msra.mxu0 0.0
    %287 = vmatprep.subr.mxu0 0.0
    %288 = vmatpush1.xpose.msra.mxu0 0.0
    %289 = vmatprep.subr.mxu0 0.0
    %290 = vmatpush1.xpose.msra.mxu0 0.0
    %291 = vmatprep.subr.mxu0 0.0
    %292 = vmatpush1.xpose.msra.mxu0 0.0
    %293 = vmatprep.subr.mxu0 0.0
    %294 = vmatpush1.xpose.msra.mxu0 0.0
    %295 = vmatprep.subr.mxu0 0.0
    %296 = vmatpush1.xpose.msra.mxu0 %v263
    %297 = vmatprep.subr.mxu0 0.0
    %298 = vmatpush2.xpose.msra.mxu0 0.0
    %299 = vmatprep.subr.mxu0 0.0
    %300 = vmatpush2.xpose.msra.mxu0 0.0
    %301 = vmatprep.subr.mxu0 0.0
    %302 = vmatpush2.xpose.msra.mxu0 0.0
    %303 = vmatprep.subr.mxu0 0.0
    %304 = vmatpush2.xpose.msra.mxu0 0.0
    %305 = vmatprep.subr.mxu0 0.0
    %306 = vmatpush2.xpose.msra.mxu0 0.0
    %307 = vmatprep.subr.mxu0 0.0
    %308 = vmatpush2.xpose.msra.mxu0 0.0
    %309 = vmatprep.subr.mxu0 0.0
    %310 = vmatpush2.xpose.msra.mxu0 0.0
    %311 = vmatprep.subr.mxu0 0.0
    %312 = vmatpush2.xpose.msra.mxu0 0.0
    %313 = vmatprep.subr.mxu0 0.0
    %314 = vmatpush2.xpose.msra.mxu0 0.0
    %315 = vmatprep.subr.mxu0 0.0
    %316 = vmatpush2.xpose.msra.mxu0 0.0
    %317 = vmatprep.subr.mxu0 0.0
    %318 = vmatpush2.xpose.msra.mxu0 0.0
    %319 = vmatprep.subr.mxu0 0.0
    %320 = vmatpush2.xpose.msra.mxu0 0.0
    %321 = vmatprep.subr.mxu0 0.0
    %322 = vmatpush2.xpose.msra.mxu0 0.0
    %323 = vmatprep.subr.mxu0 0.0
    %324 = vmatpush2.xpose.msra.mxu0 0.0
    %325 = vmatprep.subr.mxu0 0.0
    %326 = vmatpush2.xpose.msra.mxu0 0.0
    %327 = vmatprep.subr.mxu0 0.0
    %328 = vmatpush2.xpose.msra.mxu0 0.0
    %329 = vmatprep.mubr.f32.mxu0 0.0
    %330 = vmatmul.mubr.f32.gmra.mxu0 %v261
    %v331 = vpop.f32.mrf.mxu0
    %v332 = vadd.f32 0.0, %v331
    %v333 = vpop.f32.mrf.mxu0
    %334 = vdwg.mxu0
    %336 = vrot.lane.b32.xlu0 %v250, 96
    %v337 = vpop.permute.xlu0 %336
    %v338 = vsel %vm260, %v250, 0
    %v340 = vsel %vm260, %v337, 0
    %342 = vmatprep.subr.mxu0 0.0
    %343 = vmatpush1.xpose.msra.mxu0 0.0
    %344 = vmatprep.subr.mxu0 0.0
    %345 = vmatpush1.xpose.msra.mxu0 0.0
    %346 = vmatprep.subr.mxu0 0.0
    %347 = vmatpush1.xpose.msra.mxu0 0.0
    %348 = vmatprep.subr.mxu0 0.0
    %349 = vmatpush1.xpose.msra.mxu0 0.0
    %350 = vmatprep.subr.mxu0 0.0
    %351 = vmatpush1.xpose.msra.mxu0 0.0
    %352 = vmatprep.subr.mxu0 0.0
    %353 = vmatpush1.xpose.msra.mxu0 0.0
    %354 = vmatprep.subr.mxu0 0.0
    %355 = vmatpush1.xpose.msra.mxu0 0.0
    %356 = vmatprep.subr.mxu0 0.0
    %357 = vmatpush1.xpose.msra.mxu0 0.0
    %358 = vmatprep.subr.mxu0 0.0
    %359 = vmatpush1.xpose.msra.mxu0 0.0
    %360 = vmatprep.subr.mxu0 0.0
    %361 = vmatpush1.xpose.msra.mxu0 0.0
    %362 = vmatprep.subr.mxu0 0.0
    %363 = vmatpush1.xpose.msra.mxu0 0.0
    %364 = vmatprep.subr.mxu0 0.0
    %365 = vmatpush1.xpose.msra.mxu0 0.0
    %366 = vmatprep.subr.mxu0 0.0
    %367 = vmatpush1.xpose.msra.mxu0 0.0
    %368 = vmatprep.subr.mxu0 0.0
    %369 = vmatpush1.xpose.msra.mxu0 0.0
    %370 = vmatprep.subr.mxu0 0.0
    %371 = vmatpush1.xpose.msra.mxu0 0.0
    %372 = vmatprep.subr.mxu0 0.0
    %373 = vmatpush1.xpose.msra.mxu0 %v340
    %374 = vmatprep.subr.mxu0 0.0
    %375 = vmatpush2.xpose.msra.mxu0 0.0
    %376 = vmatprep.subr.mxu0 0.0
    %377 = vmatpush2.xpose.msra.mxu0 0.0
    %378 = vmatprep.subr.mxu0 0.0
    %379 = vmatpush2.xpose.msra.mxu0 0.0
    %380 = vmatprep.subr.mxu0 0.0
    %381 = vmatpush2.xpose.msra.mxu0 0.0
    %382 = vmatprep.subr.mxu0 0.0
    %383 = vmatpush2.xpose.msra.mxu0 0.0
    %384 = vmatprep.subr.mxu0 0.0
    %385 = vmatpush2.xpose.msra.mxu0 0.0
    %386 = vmatprep.subr.mxu0 0.0
    %387 = vmatpush2.xpose.msra.mxu0 0.0
    %388 = vmatprep.subr.mxu0 0.0
    %389 = vmatpush2.xpose.msra.mxu0 0.0
    %390 = vmatprep.subr.mxu0 0.0
    %391 = vmatpush2.xpose.msra.mxu0 0.0
    %392 = vmatprep.subr.mxu0 0.0
    %393 = vmatpush2.xpose.msra.mxu0 0.0
    %394 = vmatprep.subr.mxu0 0.0
    %395 = vmatpush2.xpose.msra.mxu0 0.0
    %396 = vmatprep.subr.mxu0 0.0
    %397 = vmatpush2.xpose.msra.mxu0 0.0
    %398 = vmatprep.subr.mxu0 0.0
    %399 = vmatpush2.xpose.msra.mxu0 0.0
    %400 = vmatprep.subr.mxu0 0.0
    %401 = vmatpush2.xpose.msra.mxu0 0.0
    %402 = vmatprep.subr.mxu0 0.0
    %403 = vmatpush2.xpose.msra.mxu0 0.0
    %404 = vmatprep.subr.mxu0 0.0
    %405 = vmatpush2.xpose.msra.mxu0 0.0
    %406 = vmatprep.mubr.f32.mxu0 0.0
    %407 = vmatmul.mubr.f32.gmra.mxu0 %v338
    %v408 = vpop.f32.mrf.mxu0
    %v409 = vadd.f32 0.0, %v408
    %v410 = vpop.f32.mrf.mxu0
    %411 = vdwg.mxu0
    %v412 = vmul.f32 %v332, 0.35355338
    %v413 = vmul.f32 %v409, 0.35355338
    %v414 = vsel %vm260, %v412, -inf
    %415 = vmax.xlane.f32.xlu0 %v414
    %v416 = vpop.xlane.xlu0 %415
    %v417 = vsel %vm260, %v413, -inf
    %418 = vmax.xlane.f32.xlu0 %v417
    %v419 = vpop.xlane.xlu0 %418
    %v420 = vsub.f32 %v412, %v416
    %v421 = vsub.f32 %v413, %v419
    %v422 = vmul.f32 %v420, 1.442695
    %v423 = vpow.pop %v422
    %v424 = vmul.f32 %v421, 1.442695
    %v425 = vpow.pop %v424
    %v426 = vsel %vm260, %v423, 0.0
    %427 = vadd.xlane.f32.xlu0 %v426
    %v428 = vpop.xlane.xlu0 %427
    %v429 = vsel %vm260, %v425, 0.0
    %430 = vadd.xlane.f32.xlu0 %v429
    %v431 = vpop.xlane.xlu0 %430
    %v432 = vrcp.pop %v428
    %v433 = vrcp.pop %v431
    %v434 = vmul.f32 %v423, %v432
    %v435 = vmul.f32 %v425, %v433
    %436 = vrot.lane.b32.xlu0 %v245, 64
    %v437 = vpop.permute.xlu0 %436
    %v440 = vsel %vm260, %v434, 0
    %442 = vmatprep.subr.mxu0 0.0
    %443 = vmatpush1.msra.mxu0 0.0
    %444 = vmatprep.subr.mxu0 0.0
    %445 = vmatpush1.msra.mxu0 0.0
    %446 = vmatprep.subr.mxu0 0.0
    %447 = vmatpush1.msra.mxu0 0.0
    %448 = vmatprep.subr.mxu0 0.0
    %449 = vmatpush1.msra.mxu0 0.0
    %450 = vmatprep.subr.mxu0 0.0
    %451 = vmatpush1.msra.mxu0 0.0
    %452 = vmatprep.subr.mxu0 0.0
    %453 = vmatpush1.msra.mxu0 0.0
    %454 = vmatprep.subr.mxu0 0.0
    %455 = vmatpush1.msra.mxu0 0.0
    %456 = vmatprep.subr.mxu0 0.0
    %457 = vmatpush1.msra.mxu0 0.0
    %458 = vmatprep.subr.mxu0 0.0
    %459 = vmatpush1.msra.mxu0 0.0
    %460 = vmatprep.subr.mxu0 0.0
    %461 = vmatpush1.msra.mxu0 0.0
    %462 = vmatprep.subr.mxu0 0.0
    %463 = vmatpush1.msra.mxu0 0.0
    %464 = vmatprep.subr.mxu0 0.0
    %465 = vmatpush1.msra.mxu0 0.0
    %466 = vmatprep.subr.mxu0 0.0
    %467 = vmatpush1.msra.mxu0 0.0
    %468 = vmatprep.subr.mxu0 0.0
    %469 = vmatpush1.msra.mxu0 0.0
    %470 = vmatprep.subr.mxu0 0.0
    %471 = vmatpush1.msra.mxu0 0.0
    %472 = vmatprep.subr.mxu0 0.0
    %473 = vmatpush1.msra.mxu0 %v437
    %474 = vmatprep.subr.mxu0 0.0
    %475 = vmatpush2.msra.mxu0 0.0
    %476 = vmatprep.subr.mxu0 0.0
    %477 = vmatpush2.msra.mxu0 0.0
    %478 = vmatprep.subr.mxu0 0.0
    %479 = vmatpush2.msra.mxu0 0.0
    %480 = vmatprep.subr.mxu0 0.0
    %481 = vmatpush2.msra.mxu0 0.0
    %482 = vmatprep.subr.mxu0 0.0
    %483 = vmatpush2.msra.mxu0 0.0
    %484 = vmatprep.subr.mxu0 0.0
    %485 = vmatpush2.msra.mxu0 0.0
    %486 = vmatprep.subr.mxu0 0.0
    %487 = vmatpush2.msra.mxu0 0.0
    %488 = vmatprep.subr.mxu0 0.0
    %489 = vmatpush2.msra.mxu0 0.0
    %490 = vmatprep.subr.mxu0 0.0
    %491 = vmatpush2.msra.mxu0 0.0
    %492 = vmatprep.subr.mxu0 0.0
    %493 = vmatpush2.msra.mxu0 0.0
    %494 = vmatprep.subr.mxu0 0.0
    %495 = vmatpush2.msra.mxu0 0.0
    %496 = vmatprep.subr.mxu0 0.0
    %497 = vmatpush2.msra.mxu0 0.0
    %498 = vmatprep.subr.mxu0 0.0
    %499 = vmatpush2.msra.mxu0 0.0
    %500 = vmatprep.subr.mxu0 0.0
    %501 = vmatpush2.msra.mxu0 0.0
    %502 = vmatprep.subr.mxu0 0.0
    %503 = vmatpush2.msra.mxu0 0.0
    %504 = vmatprep.subr.mxu0 0.0
    %505 = vmatpush2.msra.mxu0 0.0
    %506 = vmatprep.mubr.f32.mxu0 0.0
    %507 = vmatmul.mubr.f32.gmra.mxu0 %v440
    %v508 = vpop.f32.mrf.mxu0
    %v509 = vadd.f32 0.0, %v508
    %v510 = vpop.f32.mrf.mxu0
    %511 = vdwg.mxu0
    %512 = vrot.lane.b32.xlu0 %v250, 64
    %v513 = vpop.permute.xlu0 %512
    %v516 = vsel %vm260, %v435, 0
    %518 = vmatprep.subr.mxu0 0.0
    %519 = vmatpush1.msra.mxu0 0.0
    %520 = vmatprep.subr.mxu0 0.0
    %521 = vmatpush1.msra.mxu0 0.0
    %522 = vmatprep.subr.mxu0 0.0
    %523 = vmatpush1.msra.mxu0 0.0
    %524 = vmatprep.subr.mxu0 0.0
    %525 = vmatpush1.msra.mxu0 0.0
    %526 = vmatprep.subr.mxu0 0.0
    %527 = vmatpush1.msra.mxu0 0.0
    %528 = vmatprep.subr.mxu0 0.0
    %529 = vmatpush1.msra.mxu0 0.0
    %530 = vmatprep.subr.mxu0 0.0
    %531 = vmatpush1.msra.mxu0 0.0
    %532 = vmatprep.subr.mxu0 0.0
    %533 = vmatpush1.msra.mxu0 0.0
    %534 = vmatprep.subr.mxu0 0.0
    %535 = vmatpush1.msra.mxu0 0.0
    %536 = vmatprep.subr.mxu0 0.0
    %537 = vmatpush1.msra.mxu0 0.0
    %538 = vmatprep.subr.mxu0 0.0
    %539 = vmatpush1.msra.mxu0 0.0
    %540 = vmatprep.subr.mxu0 0.0
    %541 = vmatpush1.msra.mxu0 0.0
    %542 = vmatprep.subr.mxu0 0.0
    %543 = vmatpush1.msra.mxu0 0.0
    %544 = vmatprep.subr.mxu0 0.0
    %545 = vmatpush1.msra.mxu0 0.0
    %546 = vmatprep.subr.mxu0 0.0
    %547 = vmatpush1.msra.mxu0 0.0
    %548 = vmatprep.subr.mxu0 0.0
    %549 = vmatpush1.msra.mxu0 %v513
    %550 = vmatprep.subr.mxu0 0.0
    %551 = vmatpush2.msra.mxu0 0.0
    %552 = vmatprep.subr.mxu0 0.0
    %553 = vmatpush2.msra.mxu0 0.0
    %554 = vmatprep.subr.mxu0 0.0
    %555 = vmatpush2.msra.mxu0 0.0
    %556 = vmatprep.subr.mxu0 0.0
    %557 = vmatpush2.msra.mxu0 0.0
    %558 = vmatprep.subr.mxu0 0.0
    %559 = vmatpush2.msra.mxu0 0.0
    %560 = vmatprep.subr.mxu0 0.0
    %561 = vmatpush2.msra.mxu0 0.0
    %562 = vmatprep.subr.mxu0 0.0
    %563 = vmatpush2.msra.mxu0 0.0
    %564 = vmatprep.subr.mxu0 0.0
    %565 = vmatpush2.msra.mxu0 0.0
    %566 = vmatprep.subr.mxu0 0.0
    %567 = vmatpush2.msra.mxu0 0.0
    %568 = vmatprep.subr.mxu0 0.0
    %569 = vmatpush2.msra.mxu0 0.0
    %570 = vmatprep.subr.mxu0 0.0
    %571 = vmatpush2.msra.mxu0 0.0
    %572 = vmatprep.subr.mxu0 0.0
    %573 = vmatpush2.msra.mxu0 0.0
    %574 = vmatprep.subr.mxu0 0.0
    %575 = vmatpush2.msra.mxu0 0.0
    %576 = vmatprep.subr.mxu0 0.0
    %577 = vmatpush2.msra.mxu0 0.0
    %578 = vmatprep.subr.mxu0 0.0
    %579 = vmatpush2.msra.mxu0 0.0
    %580 = vmatprep.subr.mxu0 0.0
    %581 = vmatpush2.msra.mxu0 0.0
    %582 = vmatprep.mubr.f32.mxu0 0.0
    %583 = vmatmul.mubr.f32.gmra.mxu0 %v516
    %v584 = vpop.f32.mrf.mxu0
    %v585 = vadd.f32 0.0, %v584
    %v586 = vpop.f32.mrf.mxu0
    %587 = vdwg.mxu0
    %588 = vrot.lane.b32.xlu0 %v245, 120
    %v589 = vpop.permute.xlu0 %588
    %590 = vrot.lane.b32.xlu0 %v245, 88
    %v591 = vpop.permute.xlu0 %590
    %v592 = vsel %vm260, %v589, 0
    %v594 = vsel %vm260, %v591, 0
    %596 = vmatprep.subr.mxu0 0.0
    %597 = vmatpush1.xpose.msra.mxu0 0.0
    %598 = vmatprep.subr.mxu0 0.0
    %599 = vmatpush1.xpose.msra.mxu0 0.0
    %600 = vmatprep.subr.mxu0 0.0
    %601 = vmatpush1.xpose.msra.mxu0 0.0
    %602 = vmatprep.subr.mxu0 0.0
    %603 = vmatpush1.xpose.msra.mxu0 0.0
    %604 = vmatprep.subr.mxu0 0.0
    %605 = vmatpush1.xpose.msra.mxu0 0.0
    %606 = vmatprep.subr.mxu0 0.0
    %607 = vmatpush1.xpose.msra.mxu0 0.0
    %608 = vmatprep.subr.mxu0 0.0
    %609 = vmatpush1.xpose.msra.mxu0 0.0
    %610 = vmatprep.subr.mxu0 0.0
    %611 = vmatpush1.xpose.msra.mxu0 0.0
    %612 = vmatprep.subr.mxu0 0.0
    %613 = vmatpush1.xpose.msra.mxu0 0.0
    %614 = vmatprep.subr.mxu0 0.0
    %615 = vmatpush1.xpose.msra.mxu0 0.0
    %616 = vmatprep.subr.mxu0 0.0
    %617 = vmatpush1.xpose.msra.mxu0 0.0
    %618 = vmatprep.subr.mxu0 0.0
    %619 = vmatpush1.xpose.msra.mxu0 0.0
    %620 = vmatprep.subr.mxu0 0.0
    %621 = vmatpush1.xpose.msra.mxu0 0.0
    %622 = vmatprep.subr.mxu0 0.0
    %623 = vmatpush1.xpose.msra.mxu0 0.0
    %624 = vmatprep.subr.mxu0 0.0
    %625 = vmatpush1.xpose.msra.mxu0 0.0
    %626 = vmatprep.subr.mxu0 0.0
    %627 = vmatpush1.xpose.msra.mxu0 %v594
    %628 = vmatprep.subr.mxu0 0.0
    %629 = vmatpush2.xpose.msra.mxu0 0.0
    %630 = vmatprep.subr.mxu0 0.0
    %631 = vmatpush2.xpose.msra.mxu0 0.0
    %632 = vmatprep.subr.mxu0 0.0
    %633 = vmatpush2.xpose.msra.mxu0 0.0
    %634 = vmatprep.subr.mxu0 0.0
    %635 = vmatpush2.xpose.msra.mxu0 0.0
    %636 = vmatprep.subr.mxu0 0.0
    %637 = vmatpush2.xpose.msra.mxu0 0.0
    %638 = vmatprep.subr.mxu0 0.0
    %639 = vmatpush2.xpose.msra.mxu0 0.0
    %640 = vmatprep.subr.mxu0 0.0
    %641 = vmatpush2.xpose.msra.mxu0 0.0
    %642 = vmatprep.subr.mxu0 0.0
    %643 = vmatpush2.xpose.msra.mxu0 0.0
    %644 = vmatprep.subr.mxu0 0.0
    %645 = vmatpush2.xpose.msra.mxu0 0.0
    %646 = vmatprep.subr.mxu0 0.0
    %647 = vmatpush2.xpose.msra.mxu0 0.0
    %648 = vmatprep.subr.mxu0 0.0
    %649 = vmatpush2.xpose.msra.mxu0 0.0
    %650 = vmatprep.subr.mxu0 0.0
    %651 = vmatpush2.xpose.msra.mxu0 0.0
    %652 = vmatprep.subr.mxu0 0.0
    %653 = vmatpush2.xpose.msra.mxu0 0.0
    %654 = vmatprep.subr.mxu0 0.0
    %655 = vmatpush2.xpose.msra.mxu0 0.0
    %656 = vmatprep.subr.mxu0 0.0
    %657 = vmatpush2.xpose.msra.mxu0 0.0
    %658 = vmatprep.subr.mxu0 0.0
    %659 = vmatpush2.xpose.msra.mxu0 0.0
    %660 = vmatprep.mubr.f32.mxu0 0.0
    %661 = vmatmul.mubr.f32.gmra.mxu0 %v592
    %v662 = vpop.f32.mrf.mxu0
    %v663 = vadd.f32 0.0, %v662
    %v664 = vpop.f32.mrf.mxu0
    %665 = vdwg.mxu0
    %666 = vrot.lane.b32.xlu0 %v250, 120
    %v667 = vpop.permute.xlu0 %666
    %668 = vrot.lane.b32.xlu0 %v250, 88
    %v669 = vpop.permute.xlu0 %668
    %v670 = vsel %vm260, %v667, 0
    %v672 = vsel %vm260, %v669, 0
    %674 = vmatprep.subr.mxu0 0.0
    %675 = vmatpush1.xpose.msra.mxu0 0.0
    %676 = vmatprep.subr.mxu0 0.0
    %677 = vmatpush1.xpose.msra.mxu0 0.0
    %678 = vmatprep.subr.mxu0 0.0
    %679 = vmatpush1.xpose.msra.mxu0 0.0
    %680 = vmatprep.subr.mxu0 0.0
    %681 = vmatpush1.xpose.msra.mxu0 0.0
    %682 = vmatprep.subr.mxu0 0.0
    %683 = vmatpush1.xpose.msra.mxu0 0.0
    %684 = vmatprep.subr.mxu0 0.0
    %685 = vmatpush1.xpose.msra.mxu0 0.0
    %686 = vmatprep.subr.mxu0 0.0
    %687 = vmatpush1.xpose.msra.mxu0 0.0
    %688 = vmatprep.subr.mxu0 0.0
    %689 = vmatpush1.xpose.msra.mxu0 0.0
    %690 = vmatprep.subr.mxu0 0.0
    %691 = vmatpush1.xpose.msra.mxu0 0.0
    %692 = vmatprep.subr.mxu0 0.0
    %693 = vmatpush1.xpose.msra.mxu0 0.0
    %694 = vmatprep.subr.mxu0 0.0
    %695 = vmatpush1.xpose.msra.mxu0 0.0
    %696 = vmatprep.subr.mxu0 0.0
    %697 = vmatpush1.xpose.msra.mxu0 0.0
    %698 = vmatprep.subr.mxu0 0.0
    %699 = vmatpush1.xpose.msra.mxu0 0.0
    %700 = vmatprep.subr.mxu0 0.0
    %701 = vmatpush1.xpose.msra.mxu0 0.0
    %702 = vmatprep.subr.mxu0 0.0
    %703 = vmatpush1.xpose.msra.mxu0 0.0
    %704 = vmatprep.subr.mxu0 0.0
    %705 = vmatpush1.xpose.msra.mxu0 %v672
    %706 = vmatprep.subr.mxu0 0.0
    %707 = vmatpush2.xpose.msra.mxu0 0.0
    %708 = vmatprep.subr.mxu0 0.0
    %709 = vmatpush2.xpose.msra.mxu0 0.0
    %710 = vmatprep.subr.mxu0 0.0
    %711 = vmatpush2.xpose.msra.mxu0 0.0
    %712 = vmatprep.subr.mxu0 0.0
    %713 = vmatpush2.xpose.msra.mxu0 0.0
    %714 = vmatprep.subr.mxu0 0.0
    %715 = vmatpush2.xpose.msra.mxu0 0.0
    %716 = vmatprep.subr.mxu0 0.0
    %717 = vmatpush2.xpose.msra.mxu0 0.0
    %718 = vmatprep.subr.mxu0 0.0
    %719 = vmatpush2.xpose.msra.mxu0 0.0
    %720 = vmatprep.subr.mxu0 0.0
    %721 = vmatpush2.xpose.msra.mxu0 0.0
    %722 = vmatprep.subr.mxu0 0.0
    %723 = vmatpush2.xpose.msra.mxu0 0.0
    %724 = vmatprep.subr.mxu0 0.0
    %725 = vmatpush2.xpose.msra.mxu0 0.0
    %726 = vmatprep.subr.mxu0 0.0
    %727 = vmatpush2.xpose.msra.mxu0 0.0
    %728 = vmatprep.subr.mxu0 0.0
    %729 = vmatpush2.xpose.msra.mxu0 0.0
    %730 = vmatprep.subr.mxu0 0.0
    %731 = vmatpush2.xpose.msra.mxu0 0.0
    %732 = vmatprep.subr.mxu0 0.0
    %733 = vmatpush2.xpose.msra.mxu0 0.0
    %734 = vmatprep.subr.mxu0 0.0
    %735 = vmatpush2.xpose.msra.mxu0 0.0
    %736 = vmatprep.subr.mxu0 0.0
    %737 = vmatpush2.xpose.msra.mxu0 0.0
    %738 = vmatprep.mubr.f32.mxu0 0.0
    %739 = vmatmul.mubr.f32.gmra.mxu0 %v670
    %v740 = vpop.f32.mrf.mxu0
    %v741 = vadd.f32 0.0, %v740
    %v742 = vpop.f32.mrf.mxu0
    %743 = vdwg.mxu0
    %v744 = vmul.f32 %v663, 0.35355338
    %v745 = vmul.f32 %v741, 0.35355338
    %v746 = vsel %vm260, %v744, -inf
    %747 = vmax.xlane.f32.xlu0 %v746
    %v748 = vpop.xlane.xlu0 %747
    %v749 = vsel %vm260, %v745, -inf
    %750 = vmax.xlane.f32.xlu0 %v749
    %v751 = vpop.xlane.xlu0 %750
    %v752 = vsub.f32 %v744, %v748
    %v753 = vsub.f32 %v745, %v751
    %v754 = vmul.f32 %v752, 1.442695
    %v755 = vpow.pop %v754
    %v756 = vmul.f32 %v753, 1.442695
    %v757 = vpow.pop %v756
    %v758 = vsel %vm260, %v755, 0.0
    %759 = vadd.xlane.f32.xlu0 %v758
    %v760 = vpop.xlane.xlu0 %759
    %v761 = vsel %vm260, %v757, 0.0
    %762 = vadd.xlane.f32.xlu0 %v761
    %v763 = vpop.xlane.xlu0 %762
    %v764 = vrcp.pop %v760
    %v765 = vrcp.pop %v763
    %v766 = vmul.f32 %v755, %v764
    %v767 = vmul.f32 %v757, %v765
    %768 = vrot.lane.b32.xlu0 %v245, 56
    %v769 = vpop.permute.xlu0 %768
    %v772 = vsel %vm260, %v766, 0
    %774 = vmatprep.subr.mxu0 0.0
    %775 = vmatpush1.msra.mxu0 0.0
    %776 = vmatprep.subr.mxu0 0.0
    %777 = vmatpush1.msra.mxu0 0.0
    %778 = vmatprep.subr.mxu0 0.0
    %779 = vmatpush1.msra.mxu0 0.0
    %780 = vmatprep.subr.mxu0 0.0
    %781 = vmatpush1.msra.mxu0 0.0
    %782 = vmatprep.subr.mxu0 0.0
    %783 = vmatpush1.msra.mxu0 0.0
    %784 = vmatprep.subr.mxu0 0.0
    %785 = vmatpush1.msra.mxu0 0.0
    %786 = vmatprep.subr.mxu0 0.0
    %787 = vmatpush1.msra.mxu0 0.0
    %788 = vmatprep.subr.mxu0 0.0
    %789 = vmatpush1.msra.mxu0 0.0
    %790 = vmatprep.subr.mxu0 0.0
    %791 = vmatpush1.msra.mxu0 0.0
    %792 = vmatprep.subr.mxu0 0.0
    %793 = vmatpush1.msra.mxu0 0.0
    %794 = vmatprep.subr.mxu0 0.0
    %795 = vmatpush1.msra.mxu0 0.0
    %796 = vmatprep.subr.mxu0 0.0
    %797 = vmatpush1.msra.mxu0 0.0
    %798 = vmatprep.subr.mxu0 0.0
    %799 = vmatpush1.msra.mxu0 0.0
    %800 = vmatprep.subr.mxu0 0.0
    %801 = vmatpush1.msra.mxu0 0.0
    %802 = vmatprep.subr.mxu0 0.0
    %803 = vmatpush1.msra.mxu0 0.0
    %804 = vmatprep.subr.mxu0 0.0
    %805 = vmatpush1.msra.mxu0 %v769
    %806 = vmatprep.subr.mxu0 0.0
    %807 = vmatpush2.msra.mxu0 0.0
    %808 = vmatprep.subr.mxu0 0.0
    %809 = vmatpush2.msra.mxu0 0.0
    %810 = vmatprep.subr.mxu0 0.0
    %811 = vmatpush2.msra.mxu0 0.0
    %812 = vmatprep.subr.mxu0 0.0
    %813 = vmatpush2.msra.mxu0 0.0
    %814 = vmatprep.subr.mxu0 0.0
    %815 = vmatpush2.msra.mxu0 0.0
    %816 = vmatprep.subr.mxu0 0.0
    %817 = vmatpush2.msra.mxu0 0.0
    %818 = vmatprep.subr.mxu0 0.0
    %819 = vmatpush2.msra.mxu0 0.0
    %820 = vmatprep.subr.mxu0 0.0
    %821 = vmatpush2.msra.mxu0 0.0
    %822 = vmatprep.subr.mxu0 0.0
    %823 = vmatpush2.msra.mxu0 0.0
    %824 = vmatprep.subr.mxu0 0.0
    %825 = vmatpush2.msra.mxu0 0.0
    %826 = vmatprep.subr.mxu0 0.0
    %827 = vmatpush2.msra.mxu0 0.0
    %828 = vmatprep.subr.mxu0 0.0
    %829 = vmatpush2.msra.mxu0 0.0
    %830 = vmatprep.subr.mxu0 0.0
    %831 = vmatpush2.msra.mxu0 0.0
    %832 = vmatprep.subr.mxu0 0.0
    %833 = vmatpush2.msra.mxu0 0.0
    %834 = vmatprep.subr.mxu0 0.0
    %835 = vmatpush2.msra.mxu0 0.0
    %836 = vmatprep.subr.mxu0 0.0
    %837 = vmatpush2.msra.mxu0 0.0
    %838 = vmatprep.mubr.f32.mxu0 0.0
    %839 = vmatmul.mubr.f32.gmra.mxu0 %v772
    %v840 = vpop.f32.mrf.mxu0
    %v841 = vadd.f32 0.0, %v840
    %v842 = vpop.f32.mrf.mxu0
    %843 = vdwg.mxu0
    %844 = vrot.lane.b32.xlu0 %v250, 56
    %v845 = vpop.permute.xlu0 %844
    %v848 = vsel %vm260, %v767, 0
    %850 = vmatprep.subr.mxu0 0.0
    %851 = vmatpush1.msra.mxu0 0.0
    %852 = vmatprep.subr.mxu0 0.0
    %853 = vmatpush1.msra.mxu0 0.0
    %854 = vmatprep.subr.mxu0 0.0
    %855 = vmatpush1.msra.mxu0 0.0
    %856 = vmatprep.subr.mxu0 0.0
    %857 = vmatpush1.msra.mxu0 0.0
    %858 = vmatprep.subr.mxu0 0.0
    %859 = vmatpush1.msra.mxu0 0.0
    %860 = vmatprep.subr.mxu0 0.0
    %861 = vmatpush1.msra.mxu0 0.0
    %862 = vmatprep.subr.mxu0 0.0
    %863 = vmatpush1.msra.mxu0 0.0
    %864 = vmatprep.subr.mxu0 0.0
    %865 = vmatpush1.msra.mxu0 0.0
    %866 = vmatprep.subr.mxu0 0.0
    %867 = vmatpush1.msra.mxu0 0.0
    %868 = vmatprep.subr.mxu0 0.0
    %869 = vmatpush1.msra.mxu0 0.0
    %870 = vmatprep.subr.mxu0 0.0
    %871 = vmatpush1.msra.mxu0 0.0
    %872 = vmatprep.subr.mxu0 0.0
    %873 = vmatpush1.msra.mxu0 0.0
    %874 = vmatprep.subr.mxu0 0.0
    %875 = vmatpush1.msra.mxu0 0.0
    %876 = vmatprep.subr.mxu0 0.0
    %877 = vmatpush1.msra.mxu0 0.0
    %878 = vmatprep.subr.mxu0 0.0
    %879 = vmatpush1.msra.mxu0 0.0
    %880 = vmatprep.subr.mxu0 0.0
    %881 = vmatpush1.msra.mxu0 %v845
    %882 = vmatprep.subr.mxu0 0.0
    %883 = vmatpush2.msra.mxu0 0.0
    %884 = vmatprep.subr.mxu0 0.0
    %885 = vmatpush2.msra.mxu0 0.0
    %886 = vmatprep.subr.mxu0 0.0
    %887 = vmatpush2.msra.mxu0 0.0
    %888 = vmatprep.subr.mxu0 0.0
    %889 = vmatpush2.msra.mxu0 0.0
    %890 = vmatprep.subr.mxu0 0.0
    %891 = vmatpush2.msra.mxu0 0.0
    %892 = vmatprep.subr.mxu0 0.0
    %893 = vmatpush2.msra.mxu0 0.0
    %894 = vmatprep.subr.mxu0 0.0
    %895 = vmatpush2.msra.mxu0 0.0
    %896 = vmatprep.subr.mxu0 0.0
    %897 = vmatpush2.msra.mxu0 0.0
    %898 = vmatprep.subr.mxu0 0.0
    %899 = vmatpush2.msra.mxu0 0.0
    %900 = vmatprep.subr.mxu0 0.0
    %901 = vmatpush2.msra.mxu0 0.0
    %902 = vmatprep.subr.mxu0 0.0
    %903 = vmatpush2.msra.mxu0 0.0
    %904 = vmatprep.subr.mxu0 0.0
    %905 = vmatpush2.msra.mxu0 0.0
    %906 = vmatprep.subr.mxu0 0.0
    %907 = vmatpush2.msra.mxu0 0.0
    %908 = vmatprep.subr.mxu0 0.0
    %909 = vmatpush2.msra.mxu0 0.0
    %910 = vmatprep.subr.mxu0 0.0
    %911 = vmatpush2.msra.mxu0 0.0
    %912 = vmatprep.subr.mxu0 0.0
    %913 = vmatpush2.msra.mxu0 0.0
    %914 = vmatprep.mubr.f32.mxu0 0.0
    %915 = vmatmul.mubr.f32.gmra.mxu0 %v848
    %v916 = vpop.f32.mrf.mxu0
    %v917 = vadd.f32 0.0, %v916
    %v918 = vpop.f32.mrf.mxu0
    %919 = vdwg.mxu0
    %v921 = vsel %vm260, %v841, 0
    %v924 = vsel %vm260, %v917, 0
    %926 = vmatprep.subr.mxu0 0.0
    %927 = vmatpush1.msra.mxu0 0.0
    %928 = vmatprep.subr.mxu0 0.0
    %929 = vmatpush1.msra.mxu0 0.0
    %930 = vmatprep.subr.mxu0 0.0
    %931 = vmatpush1.msra.mxu0 0.0
    %932 = vmatprep.subr.mxu0 0.0
    %933 = vmatpush1.msra.mxu0 0.0
    %934 = vmatprep.subr.mxu0 0.0
    %935 = vmatpush1.msra.mxu0 0.0
    %936 = vmatprep.subr.mxu0 0.0
    %937 = vmatpush1.msra.mxu0 0.0
    %938 = vmatprep.subr.mxu0 0.0
    %939 = vmatpush1.msra.mxu0 0.0
    %940 = vmatprep.subr.mxu0 0.0
    %941 = vmatpush1.msra.mxu0 0.0
    %942 = vmatprep.subr.mxu0 0.0
    %943 = vmatpush1.msra.mxu0 0.0
    %944 = vmatprep.subr.mxu0 0.0
    %945 = vmatpush1.msra.mxu0 0.0
    %946 = vmatprep.subr.mxu0 0.0
    %947 = vmatpush1.msra.mxu0 0.0
    %948 = vmatprep.subr.mxu0 0.0
    %949 = vmatpush1.msra.mxu0 0.0
    %950 = vmatprep.subr.mxu0 0.0
    %951 = vmatpush1.msra.mxu0 0.0
    %952 = vmatprep.subr.mxu0 0.0
    %953 = vmatpush1.msra.mxu0 0.0
    %954 = vmatprep.subr.mxu0 0.0
    %955 = vmatpush1.msra.mxu0 0.0
    %956 = vmatprep.subr.mxu0 0.0
    %957 = vmatpush1.msra.mxu0 %v254
    %958 = vmatprep.subr.mxu0 0.0
    %959 = vmatpush2.msra.mxu0 0.0
    %960 = vmatprep.subr.mxu0 0.0
    %961 = vmatpush2.msra.mxu0 0.0
    %962 = vmatprep.subr.mxu0 0.0
    %963 = vmatpush2.msra.mxu0 0.0
    %964 = vmatprep.subr.mxu0 0.0
    %965 = vmatpush2.msra.mxu0 0.0
    %966 = vmatprep.subr.mxu0 0.0
    %967 = vmatpush2.msra.mxu0 0.0
    %968 = vmatprep.subr.mxu0 0.0
    %969 = vmatpush2.msra.mxu0 0.0
    %970 = vmatprep.subr.mxu0 0.0
    %971 = vmatpush2.msra.mxu0 0.0
    %972 = vmatprep.subr.mxu0 0.0
    %973 = vmatpush2.msra.mxu0 0.0
    %974 = vmatprep.subr.mxu0 0.0
    %975 = vmatpush2.msra.mxu0 0.0
    %976 = vmatprep.subr.mxu0 0.0
    %977 = vmatpush2.msra.mxu0 0.0
    %978 = vmatprep.subr.mxu0 0.0
    %979 = vmatpush2.msra.mxu0 0.0
    %980 = vmatprep.subr.mxu0 0.0
    %981 = vmatpush2.msra.mxu0 0.0
    %982 = vmatprep.subr.mxu0 0.0
    %983 = vmatpush2.msra.mxu0 0.0
    %984 = vmatprep.subr.mxu0 0.0
    %985 = vmatpush2.msra.mxu0 0.0
    %986 = vmatprep.subr.mxu0 0.0
    %987 = vmatpush2.msra.mxu0 0.0
    %988 = vmatprep.subr.mxu0 0.0
    %989 = vmatpush2.msra.mxu0 0.0
    %990 = vmatprep.mubr.f32.mxu0 0.0
    %991 = vmatmul.mubr.f32.gmra.mxu0 %v921
    %v992 = vpop.f32.mrf.mxu0
    %v993 = vadd.f32 0.0, %v992
    %v994 = vpop.f32.mrf.mxu0
    %995 = vmatprep.mubr.f32.mxu0 0.0
    %996 = vmatmul.mubr.f32.gmra.mxu0 %v924
    %v997 = vpop.f32.mrf.mxu0
    %v998 = vadd.f32 0.0, %v997
    %v999 = vpop.f32.mrf.mxu0
    %1000 = vdwg.mxu0
    %v1002 = vsel %vm260, %v509, 0
    %v1005 = vsel %vm260, %v585, 0
    %1007 = vmatprep.subr.mxu0 0.0
    %1008 = vmatpush1.msra.mxu0 0.0
    %1009 = vmatprep.subr.mxu0 0.0
    %1010 = vmatpush1.msra.mxu0 0.0
    %1011 = vmatprep.subr.mxu0 0.0
    %1012 = vmatpush1.msra.mxu0 0.0
    %1013 = vmatprep.subr.mxu0 0.0
    %1014 = vmatpush1.msra.mxu0 0.0
    %1015 = vmatprep.subr.mxu0 0.0
    %1016 = vmatpush1.msra.mxu0 0.0
    %1017 = vmatprep.subr.mxu0 0.0
    %1018 = vmatpush1.msra.mxu0 0.0
    %1019 = vmatprep.subr.mxu0 0.0
    %1020 = vmatpush1.msra.mxu0 0.0
    %1021 = vmatprep.subr.mxu0 0.0
    %1022 = vmatpush1.msra.mxu0 0.0
    %1023 = vmatprep.subr.mxu0 0.0
    %1024 = vmatpush1.msra.mxu0 0.0
    %1025 = vmatprep.subr.mxu0 0.0
    %1026 = vmatpush1.msra.mxu0 0.0
    %1027 = vmatprep.subr.mxu0 0.0
    %1028 = vmatpush1.msra.mxu0 0.0
    %1029 = vmatprep.subr.mxu0 0.0
    %1030 = vmatpush1.msra.mxu0 0.0
    %1031 = vmatprep.subr.mxu0 0.0
    %1032 = vmatpush1.msra.mxu0 0.0
    %1033 = vmatprep.subr.mxu0 0.0
    %1034 = vmatpush1.msra.mxu0 0.0
    %1035 = vmatprep.subr.mxu0 0.0
    %1036 = vmatpush1.msra.mxu0 0.0
    %1037 = vmatprep.subr.mxu0 0.0
    %1038 = vmatpush1.msra.mxu0 %v253
    %1039 = vmatprep.subr.mxu0 0.0
    %1040 = vmatpush2.msra.mxu0 0.0
    %1041 = vmatprep.subr.mxu0 0.0
    %1042 = vmatpush2.msra.mxu0 0.0
    %1043 = vmatprep.subr.mxu0 0.0
    %1044 = vmatpush2.msra.mxu0 0.0
    %1045 = vmatprep.subr.mxu0 0.0
    %1046 = vmatpush2.msra.mxu0 0.0
    %1047 = vmatprep.subr.mxu0 0.0
    %1048 = vmatpush2.msra.mxu0 0.0
    %1049 = vmatprep.subr.mxu0 0.0
    %1050 = vmatpush2.msra.mxu0 0.0
    %1051 = vmatprep.subr.mxu0 0.0
    %1052 = vmatpush2.msra.mxu0 0.0
    %1053 = vmatprep.subr.mxu0 0.0
    %1054 = vmatpush2.msra.mxu0 0.0
    %1055 = vmatprep.subr.mxu0 0.0
    %1056 = vmatpush2.msra.mxu0 0.0
    %1057 = vmatprep.subr.mxu0 0.0
    %1058 = vmatpush2.msra.mxu0 0.0
    %1059 = vmatprep.subr.mxu0 0.0
    %1060 = vmatpush2.msra.mxu0 0.0
    %1061 = vmatprep.subr.mxu0 0.0
    %1062 = vmatpush2.msra.mxu0 0.0
    %1063 = vmatprep.subr.mxu0 0.0
    %1064 = vmatpush2.msra.mxu0 0.0
    %1065 = vmatprep.subr.mxu0 0.0
    %1066 = vmatpush2.msra.mxu0 0.0
    %1067 = vmatprep.subr.mxu0 0.0
    %1068 = vmatpush2.msra.mxu0 0.0
    %1069 = vmatprep.subr.mxu0 0.0
    %1070 = vmatpush2.msra.mxu0 0.0
    %1071 = vmatprep.mubr.f32.mxu0 0.0
    %1072 = vmatmul.mubr.f32.gmra.mxu0 %v1002
    %v1073 = vpop.f32.mrf.mxu0
    %v1074 = vadd.f32 %v993, %v1073
    %v1075 = vpop.f32.mrf.mxu0
    %1076 = vmatprep.mubr.f32.mxu0 0.0
    %1077 = vmatmul.mubr.f32.gmra.mxu0 %v1005
    %v1078 = vpop.f32.mrf.mxu0
    %v1079 = vadd.f32 %v998, %v1078
    %v1080 = vpop.f32.mrf.mxu0
    %1081 = vdwg.mxu0
    %1082 = vrot.lane.b32.xlu0 %v245, 112
    %v1083 = vpop.permute.xlu0 %1082
    %1084 = vrot.lane.b32.xlu0 %v245, 80
    %v1085 = vpop.permute.xlu0 %1084
    %v1086 = vsel %vm260, %v1083, 0
    %v1088 = vsel %vm260, %v1085, 0
    %1090 = vmatprep.subr.mxu0 0.0
    %1091 = vmatpush1.xpose.msra.mxu0 0.0
    %1092 = vmatprep.subr.mxu0 0.0
    %1093 = vmatpush1.xpose.msra.mxu0 0.0
    %1094 = vmatprep.subr.mxu0 0.0
    %1095 = vmatpush1.xpose.msra.mxu0 0.0
    %1096 = vmatprep.subr.mxu0 0.0
    %1097 = vmatpush1.xpose.msra.mxu0 0.0
    %1098 = vmatprep.subr.mxu0 0.0
    %1099 = vmatpush1.xpose.msra.mxu0 0.0
    %1100 = vmatprep.subr.mxu0 0.0
    %1101 = vmatpush1.xpose.msra.mxu0 0.0
    %1102 = vmatprep.subr.mxu0 0.0
    %1103 = vmatpush1.xpose.msra.mxu0 0.0
    %1104 = vmatprep.subr.mxu0 0.0
    %1105 = vmatpush1.xpose.msra.mxu0 0.0
    %1106 = vmatprep.subr.mxu0 0.0
    %1107 = vmatpush1.xpose.msra.mxu0 0.0
    %1108 = vmatprep.subr.mxu0 0.0
    %1109 = vmatpush1.xpose.msra.mxu0 0.0
    %1110 = vmatprep.subr.mxu0 0.0
    %1111 = vmatpush1.xpose.msra.mxu0 0.0
    %1112 = vmatprep.subr.mxu0 0.0
    %1113 = vmatpush1.xpose.msra.mxu0 0.0
    %1114 = vmatprep.subr.mxu0 0.0
    %1115 = vmatpush1.xpose.msra.mxu0 0.0
    %1116 = vmatprep.subr.mxu0 0.0
    %1117 = vmatpush1.xpose.msra.mxu0 0.0
    %1118 = vmatprep.subr.mxu0 0.0
    %1119 = vmatpush1.xpose.msra.mxu0 0.0
    %1120 = vmatprep.subr.mxu0 0.0
    %1121 = vmatpush1.xpose.msra.mxu0 %v1088
    %1122 = vmatprep.subr.mxu0 0.0
    %1123 = vmatpush2.xpose.msra.mxu0 0.0
    %1124 = vmatprep.subr.mxu0 0.0
    %1125 = vmatpush2.xpose.msra.mxu0 0.0
    %1126 = vmatprep.subr.mxu0 0.0
    %1127 = vmatpush2.xpose.msra.mxu0 0.0
    %1128 = vmatprep.subr.mxu0 0.0
    %1129 = vmatpush2.xpose.msra.mxu0 0.0
    %1130 = vmatprep.subr.mxu0 0.0
    %1131 = vmatpush2.xpose.msra.mxu0 0.0
    %1132 = vmatprep.subr.mxu0 0.0
    %1133 = vmatpush2.xpose.msra.mxu0 0.0
    %1134 = vmatprep.subr.mxu0 0.0
    %1135 = vmatpush2.xpose.msra.mxu0 0.0
    %1136 = vmatprep.subr.mxu0 0.0
    %1137 = vmatpush2.xpose.msra.mxu0 0.0
    %1138 = vmatprep.subr.mxu0 0.0
    %1139 = vmatpush2.xpose.msra.mxu0 0.0
    %1140 = vmatprep.subr.mxu0 0.0
    %1141 = vmatpush2.xpose.msra.mxu0 0.0
    %1142 = vmatprep.subr.mxu0 0.0
    %1143 = vmatpush2.xpose.msra.mxu0 0.0
    %1144 = vmatprep.subr.mxu0 0.0
    %1145 = vmatpush2.xpose.msra.mxu0 0.0
    %1146 = vmatprep.subr.mxu0 0.0
    %1147 = vmatpush2.xpose.msra.mxu0 0.0
    %1148 = vmatprep.subr.mxu0 0.0
    %1149 = vmatpush2.xpose.msra.mxu0 0.0
    %1150 = vmatprep.subr.mxu0 0.0
    %1151 = vmatpush2.xpose.msra.mxu0 0.0
    %1152 = vmatprep.subr.mxu0 0.0
    %1153 = vmatpush2.xpose.msra.mxu0 0.0
    %1154 = vmatprep.mubr.f32.mxu0 0.0
    %1155 = vmatmul.mubr.f32.gmra.mxu0 %v1086
    %v1156 = vpop.f32.mrf.mxu0
    %v1157 = vadd.f32 0.0, %v1156
    %v1158 = vpop.f32.mrf.mxu0
    %1159 = vdwg.mxu0
    %1160 = vrot.lane.b32.xlu0 %v250, 112
    %v1161 = vpop.permute.xlu0 %1160
    %1162 = vrot.lane.b32.xlu0 %v250, 80
    %v1163 = vpop.permute.xlu0 %1162
    %v1164 = vsel %vm260, %v1161, 0
    %v1166 = vsel %vm260, %v1163, 0
    %1168 = vmatprep.subr.mxu0 0.0
    %1169 = vmatpush1.xpose.msra.mxu0 0.0
    %1170 = vmatprep.subr.mxu0 0.0
    %1171 = vmatpush1.xpose.msra.mxu0 0.0
    %1172 = vmatprep.subr.mxu0 0.0
    %1173 = vmatpush1.xpose.msra.mxu0 0.0
    %1174 = vmatprep.subr.mxu0 0.0
    %1175 = vmatpush1.xpose.msra.mxu0 0.0
    %1176 = vmatprep.subr.mxu0 0.0
    %1177 = vmatpush1.xpose.msra.mxu0 0.0
    %1178 = vmatprep.subr.mxu0 0.0
    %1179 = vmatpush1.xpose.msra.mxu0 0.0
    %1180 = vmatprep.subr.mxu0 0.0
    %1181 = vmatpush1.xpose.msra.mxu0 0.0
    %1182 = vmatprep.subr.mxu0 0.0
    %1183 = vmatpush1.xpose.msra.mxu0 0.0
    %1184 = vmatprep.subr.mxu0 0.0
    %1185 = vmatpush1.xpose.msra.mxu0 0.0
    %1186 = vmatprep.subr.mxu0 0.0
    %1187 = vmatpush1.xpose.msra.mxu0 0.0
    %1188 = vmatprep.subr.mxu0 0.0
    %1189 = vmatpush1.xpose.msra.mxu0 0.0
    %1190 = vmatprep.subr.mxu0 0.0
    %1191 = vmatpush1.xpose.msra.mxu0 0.0
    %1192 = vmatprep.subr.mxu0 0.0
    %1193 = vmatpush1.xpose.msra.mxu0 0.0
    %1194 = vmatprep.subr.mxu0 0.0
    %1195 = vmatpush1.xpose.msra.mxu0 0.0
    %1196 = vmatprep.subr.mxu0 0.0
    %1197 = vmatpush1.xpose.msra.mxu0 0.0
    %1198 = vmatprep.subr.mxu0 0.0
    %1199 = vmatpush1.xpose.msra.mxu0 %v1166
    %1200 = vmatprep.subr.mxu0 0.0
    %1201 = vmatpush2.xpose.msra.mxu0 0.0
    %1202 = vmatprep.subr.mxu0 0.0
    %1203 = vmatpush2.xpose.msra.mxu0 0.0
    %1204 = vmatprep.subr.mxu0 0.0
    %1205 = vmatpush2.xpose.msra.mxu0 0.0
    %1206 = vmatprep.subr.mxu0 0.0
    %1207 = vmatpush2.xpose.msra.mxu0 0.0
    %1208 = vmatprep.subr.mxu0 0.0
    %1209 = vmatpush2.xpose.msra.mxu0 0.0
    %1210 = vmatprep.subr.mxu0 0.0
    %1211 = vmatpush2.xpose.msra.mxu0 0.0
    %1212 = vmatprep.subr.mxu0 0.0
    %1213 = vmatpush2.xpose.msra.mxu0 0.0
    %1214 = vmatprep.subr.mxu0 0.0
    %1215 = vmatpush2.xpose.msra.mxu0 0.0
    %1216 = vmatprep.subr.mxu0 0.0
    %1217 = vmatpush2.xpose.msra.mxu0 0.0
    %1218 = vmatprep.subr.mxu0 0.0
    %1219 = vmatpush2.xpose.msra.mxu0 0.0
    %1220 = vmatprep.subr.mxu0 0.0
    %1221 = vmatpush2.xpose.msra.mxu0 0.0
    %1222 = vmatprep.subr.mxu0 0.0
    %1223 = vmatpush2.xpose.msra.mxu0 0.0
    %1224 = vmatprep.subr.mxu0 0.0
    %1225 = vmatpush2.xpose.msra.mxu0 0.0
    %1226 = vmatprep.subr.mxu0 0.0
    %1227 = vmatpush2.xpose.msra.mxu0 0.0
    %1228 = vmatprep.subr.mxu0 0.0
    %1229 = vmatpush2.xpose.msra.mxu0 0.0
    %1230 = vmatprep.subr.mxu0 0.0
    %1231 = vmatpush2.xpose.msra.mxu0 0.0
    %1232 = vmatprep.mubr.f32.mxu0 0.0
    %1233 = vmatmul.mubr.f32.gmra.mxu0 %v1164
    %v1234 = vpop.f32.mrf.mxu0
    %v1235 = vadd.f32 0.0, %v1234
    %v1236 = vpop.f32.mrf.mxu0
    %1237 = vdwg.mxu0
    %v1238 = vmul.f32 %v1157, 0.35355338
    %v1239 = vmul.f32 %v1235, 0.35355338
    %v1240 = vsel %vm260, %v1238, -inf
    %1241 = vmax.xlane.f32.xlu0 %v1240
    %v1242 = vpop.xlane.xlu0 %1241
    %v1243 = vsel %vm260, %v1239, -inf
    %1244 = vmax.xlane.f32.xlu0 %v1243
    %v1245 = vpop.xlane.xlu0 %1244
    %v1246 = vsub.f32 %v1238, %v1242
    %v1247 = vsub.f32 %v1239, %v1245
    %v1248 = vmul.f32 %v1246, 1.442695
    %v1249 = vpow.pop %v1248
    %v1250 = vmul.f32 %v1247, 1.442695
    %v1251 = vpow.pop %v1250
    %v1252 = vsel %vm260, %v1249, 0.0
    %1253 = vadd.xlane.f32.xlu0 %v1252
    %v1254 = vpop.xlane.xlu0 %1253
    %v1255 = vsel %vm260, %v1251, 0.0
    %1256 = vadd.xlane.f32.xlu0 %v1255
    %v1257 = vpop.xlane.xlu0 %1256
    %v1258 = vrcp.pop %v1254
    %v1259 = vrcp.pop %v1257
    %v1260 = vmul.f32 %v1249, %v1258
    %v1261 = vmul.f32 %v1251, %v1259
    %1262 = vrot.lane.b32.xlu0 %v245, 48
    %v1263 = vpop.permute.xlu0 %1262
    %v1266 = vsel %vm260, %v1260, 0
    %1268 = vmatprep.subr.mxu0 0.0
    %1269 = vmatpush1.msra.mxu0 0.0
    %1270 = vmatprep.subr.mxu0 0.0
    %1271 = vmatpush1.msra.mxu0 0.0
    %1272 = vmatprep.subr.mxu0 0.0
    %1273 = vmatpush1.msra.mxu0 0.0
    %1274 = vmatprep.subr.mxu0 0.0
    %1275 = vmatpush1.msra.mxu0 0.0
    %1276 = vmatprep.subr.mxu0 0.0
    %1277 = vmatpush1.msra.mxu0 0.0
    %1278 = vmatprep.subr.mxu0 0.0
    %1279 = vmatpush1.msra.mxu0 0.0
    %1280 = vmatprep.subr.mxu0 0.0
    %1281 = vmatpush1.msra.mxu0 0.0
    %1282 = vmatprep.subr.mxu0 0.0
    %1283 = vmatpush1.msra.mxu0 0.0
    %1284 = vmatprep.subr.mxu0 0.0
    %1285 = vmatpush1.msra.mxu0 0.0
    %1286 = vmatprep.subr.mxu0 0.0
    %1287 = vmatpush1.msra.mxu0 0.0
    %1288 = vmatprep.subr.mxu0 0.0
    %1289 = vmatpush1.msra.mxu0 0.0
    %1290 = vmatprep.subr.mxu0 0.0
    %1291 = vmatpush1.msra.mxu0 0.0
    %1292 = vmatprep.subr.mxu0 0.0
    %1293 = vmatpush1.msra.mxu0 0.0
    %1294 = vmatprep.subr.mxu0 0.0
    %1295 = vmatpush1.msra.mxu0 0.0
    %1296 = vmatprep.subr.mxu0 0.0
    %1297 = vmatpush1.msra.mxu0 0.0
    %1298 = vmatprep.subr.mxu0 0.0
    %1299 = vmatpush1.msra.mxu0 %v1263
    %1300 = vmatprep.subr.mxu0 0.0
    %1301 = vmatpush2.msra.mxu0 0.0
    %1302 = vmatprep.subr.mxu0 0.0
    %1303 = vmatpush2.msra.mxu0 0.0
    %1304 = vmatprep.subr.mxu0 0.0
    %1305 = vmatpush2.msra.mxu0 0.0
    %1306 = vmatprep.subr.mxu0 0.0
    %1307 = vmatpush2.msra.mxu0 0.0
    %1308 = vmatprep.subr.mxu0 0.0
    %1309 = vmatpush2.msra.mxu0 0.0
    %1310 = vmatprep.subr.mxu0 0.0
    %1311 = vmatpush2.msra.mxu0 0.0
    %1312 = vmatprep.subr.mxu0 0.0
    %1313 = vmatpush2.msra.mxu0 0.0
    %1314 = vmatprep.subr.mxu0 0.0
    %1315 = vmatpush2.msra.mxu0 0.0
    %1316 = vmatprep.subr.mxu0 0.0
    %1317 = vmatpush2.msra.mxu0 0.0
    %1318 = vmatprep.subr.mxu0 0.0
    %1319 = vmatpush2.msra.mxu0 0.0
    %1320 = vmatprep.subr.mxu0 0.0
    %1321 = vmatpush2.msra.mxu0 0.0
    %1322 = vmatprep.subr.mxu0 0.0
    %1323 = vmatpush2.msra.mxu0 0.0
    %1324 = vmatprep.subr.mxu0 0.0
    %1325 = vmatpush2.msra.mxu0 0.0
    %1326 = vmatprep.subr.mxu0 0.0
    %1327 = vmatpush2.msra.mxu0 0.0
    %1328 = vmatprep.subr.mxu0 0.0
    %1329 = vmatpush2.msra.mxu0 0.0
    %1330 = vmatprep.subr.mxu0 0.0
    %1331 = vmatpush2.msra.mxu0 0.0
    %1332 = vmatprep.mubr.f32.mxu0 0.0
    %1333 = vmatmul.mubr.f32.gmra.mxu0 %v1266
    %v1334 = vpop.f32.mrf.mxu0
    %v1335 = vadd.f32 0.0, %v1334
    %v1336 = vpop.f32.mrf.mxu0
    %1337 = vdwg.mxu0
    %1338 = vrot.lane.b32.xlu0 %v250, 48
    %v1339 = vpop.permute.xlu0 %1338
    %v1342 = vsel %vm260, %v1261, 0
    %1344 = vmatprep.subr.mxu0 0.0
    %1345 = vmatpush1.msra.mxu0 0.0
    %1346 = vmatprep.subr.mxu0 0.0
    %1347 = vmatpush1.msra.mxu0 0.0
    %1348 = vmatprep.subr.mxu0 0.0
    %1349 = vmatpush1.msra.mxu0 0.0
    %1350 = vmatprep.subr.mxu0 0.0
    %1351 = vmatpush1.msra.mxu0 0.0
    %1352 = vmatprep.subr.mxu0 0.0
    %1353 = vmatpush1.msra.mxu0 0.0
    %1354 = vmatprep.subr.mxu0 0.0
    %1355 = vmatpush1.msra.mxu0 0.0
    %1356 = vmatprep.subr.mxu0 0.0
    %1357 = vmatpush1.msra.mxu0 0.0
    %1358 = vmatprep.subr.mxu0 0.0
    %1359 = vmatpush1.msra.mxu0 0.0
    %1360 = vmatprep.subr.mxu0 0.0
    %1361 = vmatpush1.msra.mxu0 0.0
    %1362 = vmatprep.subr.mxu0 0.0
    %1363 = vmatpush1.msra.mxu0 0.0
    %1364 = vmatprep.subr.mxu0 0.0
    %1365 = vmatpush1.msra.mxu0 0.0
    %1366 = vmatprep.subr.mxu0 0.0
    %1367 = vmatpush1.msra.mxu0 0.0
    %1368 = vmatprep.subr.mxu0 0.0
    %1369 = vmatpush1.msra.mxu0 0.0
    %1370 = vmatprep.subr.mxu0 0.0
    %1371 = vmatpush1.msra.mxu0 0.0
    %1372 = vmatprep.subr.mxu0 0.0
    %1373 = vmatpush1.msra.mxu0 0.0
    %1374 = vmatprep.subr.mxu0 0.0
    %1375 = vmatpush1.msra.mxu0 %v1339
    %1376 = vmatprep.subr.mxu0 0.0
    %1377 = vmatpush2.msra.mxu0 0.0
    %1378 = vmatprep.subr.mxu0 0.0
    %1379 = vmatpush2.msra.mxu0 0.0
    %1380 = vmatprep.subr.mxu0 0.0
    %1381 = vmatpush2.msra.mxu0 0.0
    %1382 = vmatprep.subr.mxu0 0.0
    %1383 = vmatpush2.msra.mxu0 0.0
    %1384 = vmatprep.subr.mxu0 0.0
    %1385 = vmatpush2.msra.mxu0 0.0
    %1386 = vmatprep.subr.mxu0 0.0
    %1387 = vmatpush2.msra.mxu0 0.0
    %1388 = vmatprep.subr.mxu0 0.0
    %1389 = vmatpush2.msra.mxu0 0.0
    %1390 = vmatprep.subr.mxu0 0.0
    %1391 = vmatpush2.msra.mxu0 0.0
    %1392 = vmatprep.subr.mxu0 0.0
    %1393 = vmatpush2.msra.mxu0 0.0
    %1394 = vmatprep.subr.mxu0 0.0
    %1395 = vmatpush2.msra.mxu0 0.0
    %1396 = vmatprep.subr.mxu0 0.0
    %1397 = vmatpush2.msra.mxu0 0.0
    %1398 = vmatprep.subr.mxu0 0.0
    %1399 = vmatpush2.msra.mxu0 0.0
    %1400 = vmatprep.subr.mxu0 0.0
    %1401 = vmatpush2.msra.mxu0 0.0
    %1402 = vmatprep.subr.mxu0 0.0
    %1403 = vmatpush2.msra.mxu0 0.0
    %1404 = vmatprep.subr.mxu0 0.0
    %1405 = vmatpush2.msra.mxu0 0.0
    %1406 = vmatprep.subr.mxu0 0.0
    %1407 = vmatpush2.msra.mxu0 0.0
    %1408 = vmatprep.mubr.f32.mxu0 0.0
    %1409 = vmatmul.mubr.f32.gmra.mxu0 %v1342
    %v1410 = vpop.f32.mrf.mxu0
    %v1411 = vadd.f32 0.0, %v1410
    %v1412 = vpop.f32.mrf.mxu0
    %1413 = vdwg.mxu0
    %v1415 = vsel %vm260, %v1335, 0
    %v1418 = vsel %vm260, %v1411, 0
    %1420 = vmatprep.subr.mxu0 0.0
    %1421 = vmatpush1.msra.mxu0 0.0
    %1422 = vmatprep.subr.mxu0 0.0
    %1423 = vmatpush1.msra.mxu0 0.0
    %1424 = vmatprep.subr.mxu0 0.0
    %1425 = vmatpush1.msra.mxu0 0.0
    %1426 = vmatprep.subr.mxu0 0.0
    %1427 = vmatpush1.msra.mxu0 0.0
    %1428 = vmatprep.subr.mxu0 0.0
    %1429 = vmatpush1.msra.mxu0 0.0
    %1430 = vmatprep.subr.mxu0 0.0
    %1431 = vmatpush1.msra.mxu0 0.0
    %1432 = vmatprep.subr.mxu0 0.0
    %1433 = vmatpush1.msra.mxu0 0.0
    %1434 = vmatprep.subr.mxu0 0.0
    %1435 = vmatpush1.msra.mxu0 0.0
    %1436 = vmatprep.subr.mxu0 0.0
    %1437 = vmatpush1.msra.mxu0 0.0
    %1438 = vmatprep.subr.mxu0 0.0
    %1439 = vmatpush1.msra.mxu0 0.0
    %1440 = vmatprep.subr.mxu0 0.0
    %1441 = vmatpush1.msra.mxu0 0.0
    %1442 = vmatprep.subr.mxu0 0.0
    %1443 = vmatpush1.msra.mxu0 0.0
    %1444 = vmatprep.subr.mxu0 0.0
    %1445 = vmatpush1.msra.mxu0 0.0
    %1446 = vmatprep.subr.mxu0 0.0
    %1447 = vmatpush1.msra.mxu0 0.0
    %1448 = vmatprep.subr.mxu0 0.0
    %1449 = vmatpush1.msra.mxu0 0.0
    %1450 = vmatprep.subr.mxu0 0.0
    %1451 = vmatpush1.msra.mxu0 %v255
    %1452 = vmatprep.subr.mxu0 0.0
    %1453 = vmatpush2.msra.mxu0 0.0
    %1454 = vmatprep.subr.mxu0 0.0
    %1455 = vmatpush2.msra.mxu0 0.0
    %1456 = vmatprep.subr.mxu0 0.0
    %1457 = vmatpush2.msra.mxu0 0.0
    %1458 = vmatprep.subr.mxu0 0.0
    %1459 = vmatpush2.msra.mxu0 0.0
    %1460 = vmatprep.subr.mxu0 0.0
    %1461 = vmatpush2.msra.mxu0 0.0
    %1462 = vmatprep.subr.mxu0 0.0
    %1463 = vmatpush2.msra.mxu0 0.0
    %1464 = vmatprep.subr.mxu0 0.0
    %1465 = vmatpush2.msra.mxu0 0.0
    %1466 = vmatprep.subr.mxu0 0.0
    %1467 = vmatpush2.msra.mxu0 0.0
    %1468 = vmatprep.subr.mxu0 0.0
    %1469 = vmatpush2.msra.mxu0 0.0
    %1470 = vmatprep.subr.mxu0 0.0
    %1471 = vmatpush2.msra.mxu0 0.0
    %1472 = vmatprep.subr.mxu0 0.0
    %1473 = vmatpush2.msra.mxu0 0.0
    %1474 = vmatprep.subr.mxu0 0.0
    %1475 = vmatpush2.msra.mxu0 0.0
    %1476 = vmatprep.subr.mxu0 0.0
    %1477 = vmatpush2.msra.mxu0 0.0
    %1478 = vmatprep.subr.mxu0 0.0
    %1479 = vmatpush2.msra.mxu0 0.0
    %1480 = vmatprep.subr.mxu0 0.0
    %1481 = vmatpush2.msra.mxu0 0.0
    %1482 = vmatprep.subr.mxu0 0.0
    %1483 = vmatpush2.msra.mxu0 0.0
    %1484 = vmatprep.mubr.f32.mxu0 0.0
    %1485 = vmatmul.mubr.f32.gmra.mxu0 %v1415
    %v1486 = vpop.f32.mrf.mxu0
    %v1487 = vadd.f32 0.0, %v1486
    %v1488 = vpop.f32.mrf.mxu0
    %1489 = vmatprep.mubr.f32.mxu0 0.0
    %1490 = vmatmul.mubr.f32.gmra.mxu0 %v1418
    %v1491 = vpop.f32.mrf.mxu0
    %v1492 = vadd.f32 0.0, %v1491
    %v1493 = vpop.f32.mrf.mxu0
    %1494 = vdwg.mxu0
    %v1495 = vadd.f32 %v1074, %v1487
    %v1496 = vadd.f32 %v1079, %v1492
    %1497 = vrot.lane.b32.xlu0 %v245, 104
    %v1498 = vpop.permute.xlu0 %1497
    %1499 = vrot.lane.b32.xlu0 %v245, 72
    %v1500 = vpop.permute.xlu0 %1499
    %v1501 = vsel %vm260, %v1498, 0
    %v1503 = vsel %vm260, %v1500, 0
    %1505 = vmatprep.subr.mxu0 0.0
    %1506 = vmatpush1.xpose.msra.mxu0 0.0
    %1507 = vmatprep.subr.mxu0 0.0
    %1508 = vmatpush1.xpose.msra.mxu0 0.0
    %1509 = vmatprep.subr.mxu0 0.0
    %1510 = vmatpush1.xpose.msra.mxu0 0.0
    %1511 = vmatprep.subr.mxu0 0.0
    %1512 = vmatpush1.xpose.msra.mxu0 0.0
    %1513 = vmatprep.subr.mxu0 0.0
    %1514 = vmatpush1.xpose.msra.mxu0 0.0
    %1515 = vmatprep.subr.mxu0 0.0
    %1516 = vmatpush1.xpose.msra.mxu0 0.0
    %1517 = vmatprep.subr.mxu0 0.0
    %1518 = vmatpush1.xpose.msra.mxu0 0.0
    %1519 = vmatprep.subr.mxu0 0.0
    %1520 = vmatpush1.xpose.msra.mxu0 0.0
    %1521 = vmatprep.subr.mxu0 0.0
    %1522 = vmatpush1.xpose.msra.mxu0 0.0
    %1523 = vmatprep.subr.mxu0 0.0
    %1524 = vmatpush1.xpose.msra.mxu0 0.0
    %1525 = vmatprep.subr.mxu0 0.0
    %1526 = vmatpush1.xpose.msra.mxu0 0.0
    %1527 = vmatprep.subr.mxu0 0.0
    %1528 = vmatpush1.xpose.msra.mxu0 0.0
    %1529 = vmatprep.subr.mxu0 0.0
    %1530 = vmatpush1.xpose.msra.mxu0 0.0
    %1531 = vmatprep.subr.mxu0 0.0
    %1532 = vmatpush1.xpose.msra.mxu0 0.0
    %1533 = vmatprep.subr.mxu0 0.0
    %1534 = vmatpush1.xpose.msra.mxu0 0.0
    %1535 = vmatprep.subr.mxu0 0.0
    %1536 = vmatpush1.xpose.msra.mxu0 %v1503
    %1537 = vmatprep.subr.mxu0 0.0
    %1538 = vmatpush2.xpose.msra.mxu0 0.0
    %1539 = vmatprep.subr.mxu0 0.0
    %1540 = vmatpush2.xpose.msra.mxu0 0.0
    %1541 = vmatprep.subr.mxu0 0.0
    %1542 = vmatpush2.xpose.msra.mxu0 0.0
    %1543 = vmatprep.subr.mxu0 0.0
    %1544 = vmatpush2.xpose.msra.mxu0 0.0
    %1545 = vmatprep.subr.mxu0 0.0
    %1546 = vmatpush2.xpose.msra.mxu0 0.0
    %1547 = vmatprep.subr.mxu0 0.0
    %1548 = vmatpush2.xpose.msra.mxu0 0.0
    %1549 = vmatprep.subr.mxu0 0.0
    %1550 = vmatpush2.xpose.msra.mxu0 0.0
    %1551 = vmatprep.subr.mxu0 0.0
    %1552 = vmatpush2.xpose.msra.mxu0 0.0
    %1553 = vmatprep.subr.mxu0 0.0
    %1554 = vmatpush2.xpose.msra.mxu0 0.0
    %1555 = vmatprep.subr.mxu0 0.0
    %1556 = vmatpush2.xpose.msra.mxu0 0.0
    %1557 = vmatprep.subr.mxu0 0.0
    %1558 = vmatpush2.xpose.msra.mxu0 0.0
    %1559 = vmatprep.subr.mxu0 0.0
    %1560 = vmatpush2.xpose.msra.mxu0 0.0
    %1561 = vmatprep.subr.mxu0 0.0
    %1562 = vmatpush2.xpose.msra.mxu0 0.0
    %1563 = vmatprep.subr.mxu0 0.0
    %1564 = vmatpush2.xpose.msra.mxu0 0.0
    %1565 = vmatprep.subr.mxu0 0.0
    %1566 = vmatpush2.xpose.msra.mxu0 0.0
    %1567 = vmatprep.subr.mxu0 0.0
    %1568 = vmatpush2.xpose.msra.mxu0 0.0
    %1569 = vmatprep.mubr.f32.mxu0 0.0
    %1570 = vmatmul.mubr.f32.gmra.mxu0 %v1501
    %v1571 = vpop.f32.mrf.mxu0
    %v1572 = vadd.f32 0.0, %v1571
    %v1573 = vpop.f32.mrf.mxu0
    %1574 = vdwg.mxu0
    %1575 = vrot.lane.b32.xlu0 %v250, 104
    %v1576 = vpop.permute.xlu0 %1575
    %1577 = vrot.lane.b32.xlu0 %v250, 72
    %v1578 = vpop.permute.xlu0 %1577
    %v1579 = vsel %vm260, %v1576, 0
    %v1581 = vsel %vm260, %v1578, 0
    %1583 = vmatprep.subr.mxu0 0.0
    %1584 = vmatpush1.xpose.msra.mxu0 0.0
    %1585 = vmatprep.subr.mxu0 0.0
    %1586 = vmatpush1.xpose.msra.mxu0 0.0
    %1587 = vmatprep.subr.mxu0 0.0
    %1588 = vmatpush1.xpose.msra.mxu0 0.0
    %1589 = vmatprep.subr.mxu0 0.0
    %1590 = vmatpush1.xpose.msra.mxu0 0.0
    %1591 = vmatprep.subr.mxu0 0.0
    %1592 = vmatpush1.xpose.msra.mxu0 0.0
    %1593 = vmatprep.subr.mxu0 0.0
    %1594 = vmatpush1.xpose.msra.mxu0 0.0
    %1595 = vmatprep.subr.mxu0 0.0
    %1596 = vmatpush1.xpose.msra.mxu0 0.0
    %1597 = vmatprep.subr.mxu0 0.0
    %1598 = vmatpush1.xpose.msra.mxu0 0.0
    %1599 = vmatprep.subr.mxu0 0.0
    %1600 = vmatpush1.xpose.msra.mxu0 0.0
    %1601 = vmatprep.subr.mxu0 0.0
    %1602 = vmatpush1.xpose.msra.mxu0 0.0
    %1603 = vmatprep.subr.mxu0 0.0
    %1604 = vmatpush1.xpose.msra.mxu0 0.0
    %1605 = vmatprep.subr.mxu0 0.0
    %1606 = vmatpush1.xpose.msra.mxu0 0.0
    %1607 = vmatprep.subr.mxu0 0.0
    %1608 = vmatpush1.xpose.msra.mxu0 0.0
    %1609 = vmatprep.subr.mxu0 0.0
    %1610 = vmatpush1.xpose.msra.mxu0 0.0
    %1611 = vmatprep.subr.mxu0 0.0
    %1612 = vmatpush1.xpose.msra.mxu0 0.0
    %1613 = vmatprep.subr.mxu0 0.0
    %1614 = vmatpush1.xpose.msra.mxu0 %v1581
    %1615 = vmatprep.subr.mxu0 0.0
    %1616 = vmatpush2.xpose.msra.mxu0 0.0
    %1617 = vmatprep.subr.mxu0 0.0
    %1618 = vmatpush2.xpose.msra.mxu0 0.0
    %1619 = vmatprep.subr.mxu0 0.0
    %1620 = vmatpush2.xpose.msra.mxu0 0.0
    %1621 = vmatprep.subr.mxu0 0.0
    %1622 = vmatpush2.xpose.msra.mxu0 0.0
    %1623 = vmatprep.subr.mxu0 0.0
    %1624 = vmatpush2.xpose.msra.mxu0 0.0
    %1625 = vmatprep.subr.mxu0 0.0
    %1626 = vmatpush2.xpose.msra.mxu0 0.0
    %1627 = vmatprep.subr.mxu0 0.0
    %1628 = vmatpush2.xpose.msra.mxu0 0.0
    %1629 = vmatprep.subr.mxu0 0.0
    %1630 = vmatpush2.xpose.msra.mxu0 0.0
    %1631 = vmatprep.subr.mxu0 0.0
    %1632 = vmatpush2.xpose.msra.mxu0 0.0
    %1633 = vmatprep.subr.mxu0 0.0
    %1634 = vmatpush2.xpose.msra.mxu0 0.0
    %1635 = vmatprep.subr.mxu0 0.0
    %1636 = vmatpush2.xpose.msra.mxu0 0.0
    %1637 = vmatprep.subr.mxu0 0.0
    %1638 = vmatpush2.xpose.msra.mxu0 0.0
    %1639 = vmatprep.subr.mxu0 0.0
    %1640 = vmatpush2.xpose.msra.mxu0 0.0
    %1641 = vmatprep.subr.mxu0 0.0
    %1642 = vmatpush2.xpose.msra.mxu0 0.0
    %1643 = vmatprep.subr.mxu0 0.0
    %1644 = vmatpush2.xpose.msra.mxu0 0.0
    %1645 = vmatprep.subr.mxu0 0.0
    %1646 = vmatpush2.xpose.msra.mxu0 0.0
    %1647 = vmatprep.mubr.f32.mxu0 0.0
    %1648 = vmatmul.mubr.f32.gmra.mxu0 %v1579
    %v1649 = vpop.f32.mrf.mxu0
    %v1650 = vadd.f32 0.0, %v1649
    %v1651 = vpop.f32.mrf.mxu0
    %1652 = vdwg.mxu0
    %v1653 = vmul.f32 %v1572, 0.35355338
    %v1654 = vmul.f32 %v1650, 0.35355338
    %v1655 = vsel %vm260, %v1653, -inf
    %1656 = vmax.xlane.f32.xlu0 %v1655
    %v1657 = vpop.xlane.xlu0 %1656
    %v1658 = vsel %vm260, %v1654, -inf
    %1659 = vmax.xlane.f32.xlu0 %v1658
    %v1660 = vpop.xlane.xlu0 %1659
    %v1661 = vsub.f32 %v1653, %v1657
    %v1662 = vsub.f32 %v1654, %v1660
    %v1663 = vmul.f32 %v1661, 1.442695
    %v1664 = vpow.pop %v1663
    %v1665 = vmul.f32 %v1662, 1.442695
    %v1666 = vpow.pop %v1665
    %v1667 = vsel %vm260, %v1664, 0.0
    %1668 = vadd.xlane.f32.xlu0 %v1667
    %v1669 = vpop.xlane.xlu0 %1668
    %v1670 = vsel %vm260, %v1666, 0.0
    %1671 = vadd.xlane.f32.xlu0 %v1670
    %v1672 = vpop.xlane.xlu0 %1671
    %v1673 = vrcp.pop %v1669
    %v1674 = vrcp.pop %v1672
    %v1675 = vmul.f32 %v1664, %v1673
    %v1676 = vmul.f32 %v1666, %v1674
    %1677 = vrot.lane.b32.xlu0 %v245, 40
    %v1678 = vpop.permute.xlu0 %1677
    %v1681 = vsel %vm260, %v1675, 0
    %1683 = vmatprep.subr.mxu0 0.0
    %1684 = vmatpush1.msra.mxu0 0.0
    %1685 = vmatprep.subr.mxu0 0.0
    %1686 = vmatpush1.msra.mxu0 0.0
    %1687 = vmatprep.subr.mxu0 0.0
    %1688 = vmatpush1.msra.mxu0 0.0
    %1689 = vmatprep.subr.mxu0 0.0
    %1690 = vmatpush1.msra.mxu0 0.0
    %1691 = vmatprep.subr.mxu0 0.0
    %1692 = vmatpush1.msra.mxu0 0.0
    %1693 = vmatprep.subr.mxu0 0.0
    %1694 = vmatpush1.msra.mxu0 0.0
    %1695 = vmatprep.subr.mxu0 0.0
    %1696 = vmatpush1.msra.mxu0 0.0
    %1697 = vmatprep.subr.mxu0 0.0
    %1698 = vmatpush1.msra.mxu0 0.0
    %1699 = vmatprep.subr.mxu0 0.0
    %1700 = vmatpush1.msra.mxu0 0.0
    %1701 = vmatprep.subr.mxu0 0.0
    %1702 = vmatpush1.msra.mxu0 0.0
    %1703 = vmatprep.subr.mxu0 0.0
    %1704 = vmatpush1.msra.mxu0 0.0
    %1705 = vmatprep.subr.mxu0 0.0
    %1706 = vmatpush1.msra.mxu0 0.0
    %1707 = vmatprep.subr.mxu0 0.0
    %1708 = vmatpush1.msra.mxu0 0.0
    %1709 = vmatprep.subr.mxu0 0.0
    %1710 = vmatpush1.msra.mxu0 0.0
    %1711 = vmatprep.subr.mxu0 0.0
    %1712 = vmatpush1.msra.mxu0 0.0
    %1713 = vmatprep.subr.mxu0 0.0
    %1714 = vmatpush1.msra.mxu0 %v1678
    %1715 = vmatprep.subr.mxu0 0.0
    %1716 = vmatpush2.msra.mxu0 0.0
    %1717 = vmatprep.subr.mxu0 0.0
    %1718 = vmatpush2.msra.mxu0 0.0
    %1719 = vmatprep.subr.mxu0 0.0
    %1720 = vmatpush2.msra.mxu0 0.0
    %1721 = vmatprep.subr.mxu0 0.0
    %1722 = vmatpush2.msra.mxu0 0.0
    %1723 = vmatprep.subr.mxu0 0.0
    %1724 = vmatpush2.msra.mxu0 0.0
    %1725 = vmatprep.subr.mxu0 0.0
    %1726 = vmatpush2.msra.mxu0 0.0
    %1727 = vmatprep.subr.mxu0 0.0
    %1728 = vmatpush2.msra.mxu0 0.0
    %1729 = vmatprep.subr.mxu0 0.0
    %1730 = vmatpush2.msra.mxu0 0.0
    %1731 = vmatprep.subr.mxu0 0.0
    %1732 = vmatpush2.msra.mxu0 0.0
    %1733 = vmatprep.subr.mxu0 0.0
    %1734 = vmatpush2.msra.mxu0 0.0
    %1735 = vmatprep.subr.mxu0 0.0
    %1736 = vmatpush2.msra.mxu0 0.0
    %1737 = vmatprep.subr.mxu0 0.0
    %1738 = vmatpush2.msra.mxu0 0.0
    %1739 = vmatprep.subr.mxu0 0.0
    %1740 = vmatpush2.msra.mxu0 0.0
    %1741 = vmatprep.subr.mxu0 0.0
    %1742 = vmatpush2.msra.mxu0 0.0
    %1743 = vmatprep.subr.mxu0 0.0
    %1744 = vmatpush2.msra.mxu0 0.0
    %1745 = vmatprep.subr.mxu0 0.0
    %1746 = vmatpush2.msra.mxu0 0.0
    %1747 = vmatprep.mubr.f32.mxu0 0.0
    %1748 = vmatmul.mubr.f32.gmra.mxu0 %v1681
    %v1749 = vpop.f32.mrf.mxu0
    %v1750 = vadd.f32 0.0, %v1749
    %v1751 = vpop.f32.mrf.mxu0
    %1752 = vdwg.mxu0
    %1753 = vrot.lane.b32.xlu0 %v250, 40
    %v1754 = vpop.permute.xlu0 %1753
    %v1757 = vsel %vm260, %v1676, 0
    %1759 = vmatprep.subr.mxu0 0.0
    %1760 = vmatpush1.msra.mxu0 0.0
    %1761 = vmatprep.subr.mxu0 0.0
    %1762 = vmatpush1.msra.mxu0 0.0
    %1763 = vmatprep.subr.mxu0 0.0
    %1764 = vmatpush1.msra.mxu0 0.0
    %1765 = vmatprep.subr.mxu0 0.0
    %1766 = vmatpush1.msra.mxu0 0.0
    %1767 = vmatprep.subr.mxu0 0.0
    %1768 = vmatpush1.msra.mxu0 0.0
    %1769 = vmatprep.subr.mxu0 0.0
    %1770 = vmatpush1.msra.mxu0 0.0
    %1771 = vmatprep.subr.mxu0 0.0
    %1772 = vmatpush1.msra.mxu0 0.0
    %1773 = vmatprep.subr.mxu0 0.0
    %1774 = vmatpush1.msra.mxu0 0.0
    %1775 = vmatprep.subr.mxu0 0.0
    %1776 = vmatpush1.msra.mxu0 0.0
    %1777 = vmatprep.subr.mxu0 0.0
    %1778 = vmatpush1.msra.mxu0 0.0
    %1779 = vmatprep.subr.mxu0 0.0
    %1780 = vmatpush1.msra.mxu0 0.0
    %1781 = vmatprep.subr.mxu0 0.0
    %1782 = vmatpush1.msra.mxu0 0.0
    %1783 = vmatprep.subr.mxu0 0.0
    %1784 = vmatpush1.msra.mxu0 0.0
    %1785 = vmatprep.subr.mxu0 0.0
    %1786 = vmatpush1.msra.mxu0 0.0
    %1787 = vmatprep.subr.mxu0 0.0
    %1788 = vmatpush1.msra.mxu0 0.0
    %1789 = vmatprep.subr.mxu0 0.0
    %1790 = vmatpush1.msra.mxu0 %v1754
    %1791 = vmatprep.subr.mxu0 0.0
    %1792 = vmatpush2.msra.mxu0 0.0
    %1793 = vmatprep.subr.mxu0 0.0
    %1794 = vmatpush2.msra.mxu0 0.0
    %1795 = vmatprep.subr.mxu0 0.0
    %1796 = vmatpush2.msra.mxu0 0.0
    %1797 = vmatprep.subr.mxu0 0.0
    %1798 = vmatpush2.msra.mxu0 0.0
    %1799 = vmatprep.subr.mxu0 0.0
    %1800 = vmatpush2.msra.mxu0 0.0
    %1801 = vmatprep.subr.mxu0 0.0
    %1802 = vmatpush2.msra.mxu0 0.0
    %1803 = vmatprep.subr.mxu0 0.0
    %1804 = vmatpush2.msra.mxu0 0.0
    %1805 = vmatprep.subr.mxu0 0.0
    %1806 = vmatpush2.msra.mxu0 0.0
    %1807 = vmatprep.subr.mxu0 0.0
    %1808 = vmatpush2.msra.mxu0 0.0
    %1809 = vmatprep.subr.mxu0 0.0
    %1810 = vmatpush2.msra.mxu0 0.0
    %1811 = vmatprep.subr.mxu0 0.0
    %1812 = vmatpush2.msra.mxu0 0.0
    %1813 = vmatprep.subr.mxu0 0.0
    %1814 = vmatpush2.msra.mxu0 0.0
    %1815 = vmatprep.subr.mxu0 0.0
    %1816 = vmatpush2.msra.mxu0 0.0
    %1817 = vmatprep.subr.mxu0 0.0
    %1818 = vmatpush2.msra.mxu0 0.0
    %1819 = vmatprep.subr.mxu0 0.0
    %1820 = vmatpush2.msra.mxu0 0.0
    %1821 = vmatprep.subr.mxu0 0.0
    %1822 = vmatpush2.msra.mxu0 0.0
    %1823 = vmatprep.mubr.f32.mxu0 0.0
    %1824 = vmatmul.mubr.f32.gmra.mxu0 %v1757
    %v1825 = vpop.f32.mrf.mxu0
    %v1826 = vadd.f32 0.0, %v1825
    %v1827 = vpop.f32.mrf.mxu0
    %1828 = vdwg.mxu0
    %v1830 = vsel %vm260, %v1750, 0
    %v1833 = vsel %vm260, %v1826, 0
    %1835 = vmatprep.subr.mxu0 0.0
    %1836 = vmatpush1.msra.mxu0 0.0
    %1837 = vmatprep.subr.mxu0 0.0
    %1838 = vmatpush1.msra.mxu0 0.0
    %1839 = vmatprep.subr.mxu0 0.0
    %1840 = vmatpush1.msra.mxu0 0.0
    %1841 = vmatprep.subr.mxu0 0.0
    %1842 = vmatpush1.msra.mxu0 0.0
    %1843 = vmatprep.subr.mxu0 0.0
    %1844 = vmatpush1.msra.mxu0 0.0
    %1845 = vmatprep.subr.mxu0 0.0
    %1846 = vmatpush1.msra.mxu0 0.0
    %1847 = vmatprep.subr.mxu0 0.0
    %1848 = vmatpush1.msra.mxu0 0.0
    %1849 = vmatprep.subr.mxu0 0.0
    %1850 = vmatpush1.msra.mxu0 0.0
    %1851 = vmatprep.subr.mxu0 0.0
    %1852 = vmatpush1.msra.mxu0 0.0
    %1853 = vmatprep.subr.mxu0 0.0
    %1854 = vmatpush1.msra.mxu0 0.0
    %1855 = vmatprep.subr.mxu0 0.0
    %1856 = vmatpush1.msra.mxu0 0.0
    %1857 = vmatprep.subr.mxu0 0.0
    %1858 = vmatpush1.msra.mxu0 0.0
    %1859 = vmatprep.subr.mxu0 0.0
    %1860 = vmatpush1.msra.mxu0 0.0
    %1861 = vmatprep.subr.mxu0 0.0
    %1862 = vmatpush1.msra.mxu0 0.0
    %1863 = vmatprep.subr.mxu0 0.0
    %1864 = vmatpush1.msra.mxu0 0.0
    %1865 = vmatprep.subr.mxu0 0.0
    %1866 = vmatpush1.msra.mxu0 %v256
    %1867 = vmatprep.subr.mxu0 0.0
    %1868 = vmatpush2.msra.mxu0 0.0
    %1869 = vmatprep.subr.mxu0 0.0
    %1870 = vmatpush2.msra.mxu0 0.0
    %1871 = vmatprep.subr.mxu0 0.0
    %1872 = vmatpush2.msra.mxu0 0.0
    %1873 = vmatprep.subr.mxu0 0.0
    %1874 = vmatpush2.msra.mxu0 0.0
    %1875 = vmatprep.subr.mxu0 0.0
    %1876 = vmatpush2.msra.mxu0 0.0
    %1877 = vmatprep.subr.mxu0 0.0
    %1878 = vmatpush2.msra.mxu0 0.0
    %1879 = vmatprep.subr.mxu0 0.0
    %1880 = vmatpush2.msra.mxu0 0.0
    %1881 = vmatprep.subr.mxu0 0.0
    %1882 = vmatpush2.msra.mxu0 0.0
    %1883 = vmatprep.subr.mxu0 0.0
    %1884 = vmatpush2.msra.mxu0 0.0
    %1885 = vmatprep.subr.mxu0 0.0
    %1886 = vmatpush2.msra.mxu0 0.0
    %1887 = vmatprep.subr.mxu0 0.0
    %1888 = vmatpush2.msra.mxu0 0.0
    %1889 = vmatprep.subr.mxu0 0.0
    %1890 = vmatpush2.msra.mxu0 0.0
    %1891 = vmatprep.subr.mxu0 0.0
    %1892 = vmatpush2.msra.mxu0 0.0
    %1893 = vmatprep.subr.mxu0 0.0
    %1894 = vmatpush2.msra.mxu0 0.0
    %1895 = vmatprep.subr.mxu0 0.0
    %1896 = vmatpush2.msra.mxu0 0.0
    %1897 = vmatprep.subr.mxu0 0.0
    %1898 = vmatpush2.msra.mxu0 0.0
    %1899 = vmatprep.mubr.f32.mxu0 0.0
    %1900 = vmatmul.mubr.f32.gmra.mxu0 %v1830
    %v1901 = vpop.f32.mrf.mxu0
    %v1902 = vadd.f32 0.0, %v1901
    %v1903 = vpop.f32.mrf.mxu0
    %1904 = vmatprep.mubr.f32.mxu0 0.0
    %1905 = vmatmul.mubr.f32.gmra.mxu0 %v1833
    %v1906 = vpop.f32.mrf.mxu0
    %v1907 = vadd.f32 0.0, %v1906
    %v1908 = vpop.f32.mrf.mxu0
    %1909 = vdwg.mxu0
    %v1910 = vadd.f32 %v1495, %v1902
    %v1911 = vadd.f32 %v1496, %v1907
    %v1912 = vadd.f32 %v113, %v1910
    %v1913 = vadd.f32 %v114, %v1911
    %v1914 = vld [vmem:[%s6] sm:$0x1]
    %v1916 = vlaneseq
    %v1917 = vshrl.u32 %v1916, 7
    %v1918 = vsub.s32 0, %v1917
    %v1919 = vrot.slane %v1914, %v1918
    %v1921 = vadd.f32 %v1912, %v1919
    %v1922 = vadd.f32 %v1913, %v1919
    %v1923 = vld [vmem:[%s7] sm:$0x1]
    %v1924 = vld [vmem:[%s8] sm:$0x1]
    %v1925 = vsel %vm117, %v1921, 0.0
    %1926 = vadd.xlane.f32.xlu0 %v1925
    %v1927 = vpop.xlane.xlu0 %1926
    %v1928 = vsel %vm117, %v1922, 0.0
    %1929 = vadd.xlane.f32.xlu0 %v1928
    %v1930 = vpop.xlane.xlu0 %1929
    %v1931 = vmul.f32 %v1927, %v124
    %v1932 = vmul.f32 %v1930, %v124
    %v1933 = vsub.f32 %v1921, %v1931
    %v1934 = vsub.f32 %v1922, %v1932
    %v1935 = vmul.f32 %v1933, %v1933
    %v1936 = vmul.f32 %v1934, %v1934
    %v1937 = vsel %vm117, %v1935, 0.0
    %1938 = vadd.xlane.f32.xlu0 %v1937
    %v1939 = vpop.xlane.xlu0 %1938
    %v1940 = vsel %vm117, %v1936, 0.0
    %1941 = vadd.xlane.f32.xlu0 %v1940
    %v1942 = vpop.xlane.xlu0 %1941
    %v1943 = vmul.f32 %v1939, %v124
    %v1944 = vmul.f32 %v1942, %v124
    %v1945 = vadd.f32 %v1943, 1e-05
    %v1946 = vadd.f32 %v1944, 1e-05
    %v1947 = vrsqrt.pop %v1945
    %v1948 = vrsqrt.pop %v1946
    %v1949 = vmul.f32 %v1933, %v1947
    %v1950 = vmul.f32 %v1934, %v1948
    %v1952 = vlaneseq
    %v1953 = vshrl.u32 %v1952, 7
    %v1954 = vsub.s32 0, %v1953
    %v1955 = vrot.slane %v1923, %v1954
    %v1957 = vmul.f32 %v1949, %v1955
    %v1958 = vmul.f32 %v1950, %v1955
    %v1960 = vlaneseq
    %v1961 = vshrl.u32 %v1960, 7
    %v1962 = vsub.s32 0, %v1961
    %v1963 = vrot.slane %v1924, %v1962
    %v1965 = vadd.f32 %v1957, %v1963
    %v1966 = vadd.f32 %v1958, %v1963
    %v1967 = vld [vmem:[#allocation8] sm:$0xff]
    %v1968 = vld [vmem:[#allocation8 + $0x8] sm:$0xff]
    %v1969 = vld [vmem:[#allocation8 + $0x10] sm:$0xff]
    %v1970 = vld [vmem:[#allocation8 + $0x18] sm:$0xff]
    %v1971 = vld [vmem:[%s10] sm:$0x1]
    %v1973 = vlaneseq
    %v1974 = vshrl.u32 %v1973, 7
    %v1975 = vsub.s32 0, %v1974
    %v1976 = vrot.slane %v1971, %v1975
    %v1979 = vsel %vm117, %v1965, 0
    %v1982 = vsel %vm117, %v1966, 0
    %1984 = vmatprep.subr.mxu0 0.0
    %1985 = vmatpush1.msra.mxu0 0.0
    %1986 = vmatprep.subr.mxu0 0.0
    %1987 = vmatpush1.msra.mxu0 0.0
    %1988 = vmatprep.subr.mxu0 0.0
    %1989 = vmatpush1.msra.mxu0 0.0
    %1990 = vmatprep.subr.mxu0 0.0
    %1991 = vmatpush1.msra.mxu0 0.0
    %1992 = vmatprep.subr.mxu0 0.0
    %1993 = vmatpush1.msra.mxu0 0.0
    %1994 = vmatprep.subr.mxu0 0.0
    %1995 = vmatpush1.msra.mxu0 0.0
    %1996 = vmatprep.subr.mxu0 0.0
    %1997 = vmatpush1.msra.mxu0 0.0
    %1998 = vmatprep.subr.mxu0 0.0
    %1999 = vmatpush1.msra.mxu0 0.0
    %2000 = vmatprep.subr.mxu0 0.0
    %2001 = vmatpush1.msra.mxu0 0.0
    %2002 = vmatprep.subr.mxu0 0.0
    %2003 = vmatpush1.msra.mxu0 0.0
    %2004 = vmatprep.subr.mxu0 0.0
    %2005 = vmatpush1.msra.mxu0 0.0
    %2006 = vmatprep.subr.mxu0 0.0
    %2007 = vmatpush1.msra.mxu0 0.0
    %2008 = vmatprep.subr.mxu0 0.0
    %2009 = vmatpush1.msra.mxu0 %v1970
    %2010 = vmatprep.subr.mxu0 0.0
    %2011 = vmatpush1.msra.mxu0 %v1969
    %2012 = vmatprep.subr.mxu0 0.0
    %2013 = vmatpush1.msra.mxu0 %v1968
    %2014 = vmatprep.subr.mxu0 0.0
    %2015 = vmatpush1.msra.mxu0 %v1967
    %2016 = vmatprep.subr.mxu0 0.0
    %2017 = vmatpush2.msra.mxu0 0.0
    %2018 = vmatprep.subr.mxu0 0.0
    %2019 = vmatpush2.msra.mxu0 0.0
    %2020 = vmatprep.subr.mxu0 0.0
    %2021 = vmatpush2.msra.mxu0 0.0
    %2022 = vmatprep.subr.mxu0 0.0
    %2023 = vmatpush2.msra.mxu0 0.0
    %2024 = vmatprep.subr.mxu0 0.0
    %2025 = vmatpush2.msra.mxu0 0.0
    %2026 = vmatprep.subr.mxu0 0.0
    %2027 = vmatpush2.msra.mxu0 0.0
    %2028 = vmatprep.subr.mxu0 0.0
    %2029 = vmatpush2.msra.mxu0 0.0
    %2030 = vmatprep.subr.mxu0 0.0
    %2031 = vmatpush2.msra.mxu0 0.0
    %2032 = vmatprep.subr.mxu0 0.0
    %2033 = vmatpush2.msra.mxu0 0.0
    %2034 = vmatprep.subr.mxu0 0.0
    %2035 = vmatpush2.msra.mxu0 0.0
    %2036 = vmatprep.subr.mxu0 0.0
    %2037 = vmatpush2.msra.mxu0 0.0
    %2038 = vmatprep.subr.mxu0 0.0
    %2039 = vmatpush2.msra.mxu0 0.0
    %2040 = vmatprep.subr.mxu0 0.0
    %2041 = vmatpush2.msra.mxu0 0.0
    %2042 = vmatprep.subr.mxu0 0.0
    %2043 = vmatpush2.msra.mxu0 0.0
    %2044 = vmatprep.subr.mxu0 0.0
    %2045 = vmatpush2.msra.mxu0 0.0
    %2046 = vmatprep.subr.mxu0 0.0
    %2047 = vmatpush2.msra.mxu0 0.0
    %2048 = vmatprep.mubr.f32.mxu0 0.0
    %2049 = vmatmul.mubr.f32.gmra.mxu0 %v1979
    %v2050 = vpop.f32.mrf.mxu0
    %v2051 = vadd.f32 %v1976, %v2050
    %v2052 = vpop.f32.mrf.mxu0
    %2053 = vmatprep.mubr.f32.mxu0 0.0
    %2054 = vmatmul.mubr.f32.gmra.mxu0 %v1982
    %v2055 = vpop.f32.mrf.mxu0
    %v2056 = vadd.f32 %v1976, %v2055
    %v2057 = vpop.f32.mrf.mxu0
    %2058 = vdwg.mxu0
    %v2059 = vmul.f32 %v2051, 0.5
    %v2060 = vmul.f32 %v2056, 0.5
    %v2061 = vmul.f32 %v2051, 0.70710677
    %v2062 = vmul.f32 %v2056, 0.70710677
    %v2063 = verf.f32.pop %v2061
    %v2064 = verf.f32.pop %v2062
    %v2065 = vadd.f32 %v2063, 1.0
    %v2066 = vadd.f32 %v2064, 1.0
    %v2067 = vmul.f32 %v2059, %v2065
    %v2068 = vmul.f32 %v2060, %v2066
    %v2069 = vld [vmem:[#allocation10] sm:$0xff]
    %v2070 = vld [vmem:[#allocation10 + $0x8] sm:$0xff]
    %v2071 = vld [vmem:[#allocation10 + $0x10] sm:$0xff]
    %v2072 = vld [vmem:[#allocation10 + $0x18] sm:$0xff]
    %v2073 = vld [vmem:[%s12] sm:$0x1]
    %v2075 = vlaneseq
    %v2076 = vshrl.u32 %v2075, 7
    %v2077 = vsub.s32 0, %v2076
    %v2078 = vrot.slane %v2073, %v2077
    %v2081 = vsel %vm117, %v2067, 0
    %v2084 = vsel %vm117, %v2068, 0
    %2086 = vmatprep.subr.mxu0 0.0
    %2087 = vmatpush1.msra.mxu0 0.0
    %2088 = vmatprep.subr.mxu0 0.0
    %2089 = vmatpush1.msra.mxu0 0.0
    %2090 = vmatprep.subr.mxu0 0.0
    %2091 = vmatpush1.msra.mxu0 0.0
    %2092 = vmatprep.subr.mxu0 0.0
    %2093 = vmatpush1.msra.mxu0 0.0
    %2094 = vmatprep.subr.mxu0 0.0
    %2095 = vmatpush1.msra.mxu0 0.0
    %2096 = vmatprep.subr.mxu0 0.0
    %2097 = vmatpush1.msra.mxu0 0.0
    %2098 = vmatprep.subr.mxu0 0.0
    %2099 = vmatpush1.msra.mxu0 0.0
    %2100 = vmatprep.subr.mxu0 0.0
    %2101 = vmatpush1.msra.mxu0 0.0
    %2102 = vmatprep.subr.mxu0 0.0
    %2103 = vmatpush1.msra.mxu0 0.0
    %2104 = vmatprep.subr.mxu0 0.0
    %2105 = vmatpush1.msra.mxu0 0.0
    %2106 = vmatprep.subr.mxu0 0.0
    %2107 = vmatpush1.msra.mxu0 0.0
    %2108 = vmatprep.subr.mxu0 0.0
    %2109 = vmatpush1.msra.mxu0 0.0
    %2110 = vmatprep.subr.mxu0 0.0
    %2111 = vmatpush1.msra.mxu0 %v2072
    %2112 = vmatprep.subr.mxu0 0.0
    %2113 = vmatpush1.msra.mxu0 %v2071
    %2114 = vmatprep.subr.mxu0 0.0
    %2115 = vmatpush1.msra.mxu0 %v2070
    %2116 = vmatprep.subr.mxu0 0.0
    %2117 = vmatpush1.msra.mxu0 %v2069
    %2118 = vmatprep.subr.mxu0 0.0
    %2119 = vmatpush2.msra.mxu0 0.0
    %2120 = vmatprep.subr.mxu0 0.0
    %2121 = vmatpush2.msra.mxu0 0.0
    %2122 = vmatprep.subr.mxu0 0.0
    %2123 = vmatpush2.msra.mxu0 0.0
    %2124 = vmatprep.subr.mxu0 0.0
    %2125 = vmatpush2.msra.mxu0 0.0
    %2126 = vmatprep.subr.mxu0 0.0
    %2127 = vmatpush2.msra.mxu0 0.0
    %2128 = vmatprep.subr.mxu0 0.0
    %2129 = vmatpush2.msra.mxu0 0.0
    %2130 = vmatprep.subr.mxu0 0.0
    %2131 = vmatpush2.msra.mxu0 0.0
    %2132 = vmatprep.subr.mxu0 0.0
    %2133 = vmatpush2.msra.mxu0 0.0
    %2134 = vmatprep.subr.mxu0 0.0
    %2135 = vmatpush2.msra.mxu0 0.0
    %2136 = vmatprep.subr.mxu0 0.0
    %2137 = vmatpush2.msra.mxu0 0.0
    %2138 = vmatprep.subr.mxu0 0.0
    %2139 = vmatpush2.msra.mxu0 0.0
    %2140 = vmatprep.subr.mxu0 0.0
    %2141 = vmatpush2.msra.mxu0 0.0
    %2142 = vmatprep.subr.mxu0 0.0
    %2143 = vmatpush2.msra.mxu0 0.0
    %2144 = vmatprep.subr.mxu0 0.0
    %2145 = vmatpush2.msra.mxu0 0.0
    %2146 = vmatprep.subr.mxu0 0.0
    %2147 = vmatpush2.msra.mxu0 0.0
    %2148 = vmatprep.subr.mxu0 0.0
    %2149 = vmatpush2.msra.mxu0 0.0
    %2150 = vmatprep.mubr.f32.mxu0 0.0
    %2151 = vmatmul.mubr.f32.gmra.mxu0 %v2081
    %v2152 = vpop.f32.mrf.mxu0
    %v2153 = vadd.f32 %v2078, %v2152
    %v2154 = vpop.f32.mrf.mxu0
    %2155 = vmatprep.mubr.f32.mxu0 0.0
    %2156 = vmatmul.mubr.f32.gmra.mxu0 %v2084
    %v2157 = vpop.f32.mrf.mxu0
    %v2158 = vadd.f32 %v2078, %v2157
    %v2159 = vpop.f32.mrf.mxu0
    %2160 = vdwg.mxu0
    %v2161 = vadd.f32 %v1921, %v2153
    %v2162 = vadd.f32 %v1922, %v2158
    %2163 = vst.msk [vmem:[#allocation11] sm:$0xff] %vm117, %v2161
    %2164 = vst.msk [vmem:[#allocation11 + $0x8] sm:$0xff] %vm117, %v2162
    // Predicated region
    $region74: #{tpu_custom_call.1} parent=1 // pred_check
      _
    $region75: #{tpu_custom_call.1} parent=1 // pred_check_branch
      %2166 = sbr.rel (0) target = $region77
    $region76: #{tpu_custom_call.1} parent=1 // pred_region
      %s2168 = ssub.s32 256, 256
      %2169 = vsyncadd [#allocation4], %s2168
      %s2170 = sshll.u32 [#allocation11], 4
      %s2171 = int_to_ptr.vmem [resolvable:$true] %s2170
      %2176 = dma.vmem_to_hbm [thread:$0]  %s2171, 256, %s13, [#allocation4], 128, 128, 8
    $region77: #{tpu_custom_call.1} parent=1 // pred_fallthru
      _
    // Predicated region
    $region78: #{tpu_custom_call.1} parent=1 // pred_check
      _
    $region79: #{tpu_custom_call.1} parent=1 // pred_check_branch
      %2178 = sbr.rel (0) target = $region81
    $region80: #{tpu_custom_call.1} parent=1 // pred_region
      %2179 = dma.done [#allocation4], 256
    $region81: #{tpu_custom_call.1} parent=1 // pred_fallthru
      _
    %2180 = vsyncpa [#allocation3], 1
    %2181 = vsyncpa [#allocation6], 1
    %2182 = vsyncpa [#allocation9], 1
    %2183 = vsyncpa [#allocation4], 1

</llo_original>
